<compile_context>
chip_gen: v7x
topology: tpu7x:2x2x1
jax: 0.10.0
libtpu: 0.0.40
codegen_flags: <defaults>
</compile_context>

<pallas_src>
import jax
import jax.numpy as jnp
from jax.experimental import pallas as pl
from jax.experimental.pallas import tpu as pltpu


def classifier_kernel(x_ref, w1_ref, w2_ref, b2_ref, w3_ref, b3_ref,
                      w4_ref, b4_ref, o_ref):
    """One batch tile, transposed layout: activations are (features, batch_tile)."""
    cdt = w2_ref.dtype                      # elementwise/compute dtype (bf16 fast path)

    # fc1 (+ b1 folded into the matmul via ones row / bias column) + ReLU.
    # MXU accumulates in f32; ReLU + downcast happen once on the VPU.
    h = jnp.dot(w1_ref[...], x_ref[...], preferred_element_type=jnp.float32)
    h = jnp.maximum(h.astype(cdt), 0)       # (H, Bt) compute dtype

    # fc2 + ReLU  (bias add + ReLU in compute dtype -> less VALU pressure on v6e/v7x)
    h = jnp.dot(w2_ref[...], h, preferred_element_type=jnp.float32)
    h = jnp.maximum(h.astype(cdt) + b2_ref[...], 0)

    # fc3 + ReLU
    h = jnp.dot(w3_ref[...], h, preferred_element_type=jnp.float32)
    h = jnp.maximum(h.astype(cdt) + b3_ref[...], 0)

    # fc4 (H -> 1) on VPU/XLU instead of the MXU: multiply by the w4 column
    # (broadcast across lanes, compute dtype) and reduce over the sublane /
    # feature axis with f32 accumulation.
    prod = h * w4_ref[...]                                          # (H, Bt) compute dtype
    logits = jnp.sum(prod, axis=0, keepdims=True,
                     dtype=jnp.float32) + b4_ref[0]                 # (1, Bt) f32
    out = jax.nn.sigmoid(logits).astype(o_ref.dtype)
    o_ref[...] = out.reshape(o_ref.shape)                           # (1, 1, Bt) lane-dense


def classifier_forward(x, params, *, batch_tile=None, compute_dtype=jnp.bfloat16):
    """x: (B, x_dim + phi_dim) f32, params in torch nn.Linear layout -> (B, 1) f32.

    Note: compute_dtype=bfloat16 (default) quantizes the input and inter-layer
    activations -- an intentional precision/speed trade.  Pass jnp.float32 for
    tighter (~1e-3) parity with the f32 reference.
    """
    w1, b1, w2, b2, w3, b3, w4, b4 = params      # w: (out, in), b: (out,)
    B, D = x.shape
    H = w1.shape[0]

    # Auto-select the batch tile: big enough (<=2048) to amortize the ~0.35us
    # per-grid-step overhead, small enough (>=256) that G >= 2 so both v7x
    # TensorCores get work when the batch allows it.
    if batch_tile is None:
        batch_tile = 2048
        while batch_tile > 256 and pl.cdiv(B, batch_tile) < 2:
            batch_tile //= 2
    assert batch_tile % 128 == 0, "batch_tile must be a multiple of 128 (lane width)"

    # Pad ragged batches; padded rows are zeros, flow through sigmoid (finite
    # values) and are sliced off below -- do NOT remove the [:B] slice.
    B_pad = pl.cdiv(B, batch_tile) * batch_tile
    if B_pad != B:
        x = jnp.pad(x, ((0, B_pad - B), (0, 0)))
    G = B_pad // batch_tile

    # Wrapper-side layout plumbing (free relative to the fused compute).
    # Fold b1 into fc1: ones row appended to x^T, bias column appended to W1.
    xT = jnp.concatenate([x.T, jnp.ones((1, B_pad), x.dtype)],
                         axis=0).astype(compute_dtype)              # (D+1, B_pad)
    w1c = jnp.concatenate([w1, b1.reshape(H, 1)],
                          axis=1).astype(compute_dtype)             # (H, D+1)
    w2c = w2.astype(compute_dtype)                                  # (H, H)
    w3c = w3.astype(compute_dtype)                                  # (H, H)
    b2c = b2.reshape(H, 1).astype(compute_dtype)
    b3c = b3.reshape(H, 1).astype(compute_dtype)
    w4c = w4.reshape(H, 1).astype(compute_dtype)                    # final-layer column
    b4c = b4.reshape(1).astype(jnp.float32)                         # scalar -> SMEM

    D1 = D + 1
    const = lambda i: (0, 0)                 # weights/biases resident every step

    out = pl.pallas_call(
        classifier_kernel,
        out_shape=jax.ShapeDtypeStruct((G, 1, batch_tile), jnp.float32),
        grid_spec=pltpu.PrefetchScalarGridSpec(
            num_scalar_prefetch=0,
            grid=(G,),
            in_specs=[
                pl.BlockSpec((D1, batch_tile), lambda i: (0, i)),   # x^T tile (+ones row)
                pl.BlockSpec((H, D1), const),                       # [W1 | b1]
                pl.BlockSpec((H, H), const),                        # W2
                pl.BlockSpec((H, 1), const),                        # b2
                pl.BlockSpec((H, H), const),                        # W3
                pl.BlockSpec((H, 1), const),                        # b3
                pl.BlockSpec((H, 1), const),                        # w4 column
                pl.BlockSpec(memory_space=pltpu.MemorySpace.SMEM),  # b4 scalar
            ],
            out_specs=pl.BlockSpec((1, 1, batch_tile), lambda i: (i, 0, 0)),
        ),
        compiler_params=pltpu.CompilerParams(
            dimension_semantics=("parallel",),          # megacore-shardable on v7x
            vmem_limit_bytes=48 * 1024 * 1024),         # plenty; safe on v7x's 64MB/core
    )(xT, w1c, w2c, b2c, w3c, b3c, w4c, b4c)

    # (G, 1, batch_tile) -> (B, 1); row-major reshape restores batch order.
    return out.reshape(B_pad, 1)[:B]


def init_params(key, in_dim, hidden_dim):
    """torch.nn.Linear-style init: W (out, in), b (out,), U(-1/sqrt(fan_in), +1/sqrt(fan_in))."""
    def linear(key, fan_in, fan_out):
        kw, kb = jax.random.split(key)
        bound = 1.0 / jnp.sqrt(jnp.float32(fan_in))
        w = jax.random.uniform(kw, (fan_out, fan_in), jnp.float32, -bound, bound)
        b = jax.random.uniform(kb, (fan_out,), jnp.float32, -bound, bound)
        return w, b

    k1, k2, k3, k4 = jax.random.split(key, 4)
    w1, b1 = linear(k1, in_dim, hidden_dim)
    w2, b2 = linear(k2, hidden_dim, hidden_dim)
    w3, b3 = linear(k3, hidden_dim, hidden_dim)
    w4, b4 = linear(k4, hidden_dim, 1)
    return (w1, b1, w2, b2, w3, b3, w4, b4)


def reference_forward(x, params):
    w1, b1, w2, b2, w3, b3, w4, b4 = params
    p = jax.lax.Precision.HIGHEST
    h = jnp.maximum(jnp.dot(x, w1.T, precision=p) + b1, 0.0)
    h = jnp.maximum(jnp.dot(h, w2.T, precision=p) + b2, 0.0)
    h = jnp.maximum(jnp.dot(h, w3.T, precision=p) + b3, 0.0)
    return jax.nn.sigmoid(jnp.dot(h, w4.T, precision=p) + b4)


if __name__ == "__main__":
    # Shapes consistent with Classifier(phi_dim=9, x_dim=7, hidden_dim=256)
    phi_dim, x_dim, hidden_dim = 9, 7, 256
    in_dim = x_dim + phi_dim
    batch = 300     # not a multiple of the tile -> exercises padding; auto tile gives G=2

    key = jax.random.PRNGKey(0)
    k_x, k_p = jax.random.split(key)
    x = jax.random.normal(k_x, (batch, in_dim), jnp.float32)
    params = init_params(k_p, in_dim, hidden_dim)

    ref = reference_forward(x, params)

    # f32 operand path: validates kernel semantics tightly (1e-3 contract; the
    # in-kernel matmuls use TPU default precision, not HIGHEST).
    out_f32 = jax.block_until_ready(
        classifier_forward(x, params, compute_dtype=jnp.float32))
    assert out_f32.shape == (batch, 1)
    assert jnp.allclose(out_f32, ref, atol=1e-3, rtol=1e-3), "f32 mismatch vs reference"

    # bf16 fast path (default on v5e/v6e/v7x): looser tolerance by design.
    out_bf16 = jax.block_until_ready(
        classifier_forward(x, params, compute_dtype=jnp.bfloat16))
    assert out_bf16.shape == (batch, 1)
    assert jnp.allclose(out_bf16, ref, atol=2e-2, rtol=2e-2), "bf16 mismatch vs reference"

    print("KERNEL_OK")
</pallas_src>

<mosaic_0001>
module attributes {stable_mosaic.version = 11 : i64} {
  func.func @classifier_kernel(%arg0: i32, %arg1: memref<17x256xf32, #tpu.memory_space<vmem>>, %arg2: memref<256x17xf32, #tpu.memory_space<vmem>>, %arg3: memref<256x256xf32, #tpu.memory_space<vmem>>, %arg4: memref<256x1xf32, #tpu.memory_space<vmem>>, %arg5: memref<256x256xf32, #tpu.memory_space<vmem>>, %arg6: memref<256x1xf32, #tpu.memory_space<vmem>>, %arg7: memref<256x1xf32, #tpu.memory_space<vmem>>, %arg8: memref<1xf32, #tpu.memory_space<smem>>, %arg9: memref<1x1x256xf32, #tpu.memory_space<vmem>>) attributes {dimension_semantics = [#tpu.dimension_semantics<parallel>], iteration_bounds = array<i64: 2>, scalar_prefetch = 0 : i64, scratch_operands = 0 : i64, tpu.core_type = #tpu.core_type<tc>, window_params = [{transform_indices = @transform_0, window_bounds = array<i64: 17, 256>}, {pipeline_mode = #tpu.pipeline_mode<synchronous>, transform_indices = @transform_1, window_bounds = array<i64: 256, 17>}, {pipeline_mode = #tpu.pipeline_mode<synchronous>, transform_indices = @transform_2, window_bounds = array<i64: 256, 256>}, {pipeline_mode = #tpu.pipeline_mode<synchronous>, transform_indices = @transform_3, window_bounds = array<i64: 256, 1>}, {pipeline_mode = #tpu.pipeline_mode<synchronous>, transform_indices = @transform_4, window_bounds = array<i64: 256, 256>}, {pipeline_mode = #tpu.pipeline_mode<synchronous>, transform_indices = @transform_5, window_bounds = array<i64: 256, 1>}, {pipeline_mode = #tpu.pipeline_mode<synchronous>, transform_indices = @transform_6, window_bounds = array<i64: 256, 1>}, {transform_indices = @transform_7, window_bounds = array<i64: 1>}, {transform_indices = @transform_8, window_bounds = array<i64: 1, 1, 256>}]} {
    %c0 = arith.constant 0 : index
    %c0_0 = arith.constant 0 : index
    %0 = vector.load %arg2[%c0, %c0_0] : memref<256x17xf32, #tpu.memory_space<vmem>>, vector<256x17xf32>
    %c0_1 = arith.constant 0 : index
    %c0_2 = arith.constant 0 : index
    %1 = vector.load %arg1[%c0_1, %c0_2] : memref<17x256xf32, #tpu.memory_space<vmem>>, vector<17x256xf32>
    %cst = arith.constant dense<0.000000e+00> : vector<256x256xf32>
    %2 = tpu.matmul %0, %1, %cst {dimension_numbers = #tpu.dot_dimension_numbers<[1], [0], [0], [1], [0, 0, 1, 1], [], []>} : vector<256x17xf32>, vector<17x256xf32>, vector<256x256xf32> -> vector<256x256xf32>
    %cst_3 = arith.constant 0.000000e+00 : f32
    %3 = vector.broadcast %cst_3 : f32 to vector<256x256xf32>
    %4 = arith.maximumf %2, %3 : vector<256x256xf32>
    %c0_4 = arith.constant 0 : index
    %c0_5 = arith.constant 0 : index
    %5 = vector.load %arg3[%c0_4, %c0_5] : memref<256x256xf32, #tpu.memory_space<vmem>>, vector<256x256xf32>
    %cst_6 = arith.constant dense<0.000000e+00> : vector<256x256xf32>
    %6 = tpu.matmul %5, %4, %cst_6 {dimension_numbers = #tpu.dot_dimension_numbers<[1], [0], [0], [1], [0, 0, 1, 1], [], []>} : vector<256x256xf32>, vector<256x256xf32>, vector<256x256xf32> -> vector<256x256xf32>
    %c0_7 = arith.constant 0 : index
    %c0_8 = arith.constant 0 : index
    %7 = vector.load %arg4[%c0_7, %c0_8] : memref<256x1xf32, #tpu.memory_space<vmem>>, vector<256x1xf32>
    %8 = vector.broadcast %7 : vector<256x1xf32> to vector<256x256xf32>
    %9 = arith.addf %6, %8 : vector<256x256xf32>
    %cst_9 = arith.constant 0.000000e+00 : f32
    %10 = vector.broadcast %cst_9 : f32 to vector<256x256xf32>
    %11 = arith.maximumf %9, %10 : vector<256x256xf32>
    %c0_10 = arith.constant 0 : index
    %c0_11 = arith.constant 0 : index
    %12 = vector.load %arg5[%c0_10, %c0_11] : memref<256x256xf32, #tpu.memory_space<vmem>>, vector<256x256xf32>
    %cst_12 = arith.constant dense<0.000000e+00> : vector<256x256xf32>
    %13 = tpu.matmul %12, %11, %cst_12 {dimension_numbers = #tpu.dot_dimension_numbers<[1], [0], [0], [1], [0, 0, 1, 1], [], []>} : vector<256x256xf32>, vector<256x256xf32>, vector<256x256xf32> -> vector<256x256xf32>
    %c0_13 = arith.constant 0 : index
    %c0_14 = arith.constant 0 : index
    %14 = vector.load %arg6[%c0_13, %c0_14] : memref<256x1xf32, #tpu.memory_space<vmem>>, vector<256x1xf32>
    %15 = vector.broadcast %14 : vector<256x1xf32> to vector<256x256xf32>
    %16 = arith.addf %13, %15 : vector<256x256xf32>
    %cst_15 = arith.constant 0.000000e+00 : f32
    %17 = vector.broadcast %cst_15 : f32 to vector<256x256xf32>
    %18 = arith.maximumf %16, %17 : vector<256x256xf32>
    %c0_16 = arith.constant 0 : index
    %c0_17 = arith.constant 0 : index
    %19 = vector.load %arg7[%c0_16, %c0_17] : memref<256x1xf32, #tpu.memory_space<vmem>>, vector<256x1xf32>
    %20 = vector.broadcast %19 : vector<256x1xf32> to vector<256x256xf32>
    %21 = arith.mulf %18, %20 : vector<256x256xf32>
    %cst_18 = arith.constant dense<0.000000e+00> : vector<256xf32>
    %22 = vector.multi_reduction <add>, %21, %cst_18 [0] : vector<256x256xf32> to vector<256xf32>
    %23 = vector.shape_cast %22 : vector<256xf32> to vector<1x256xf32>
    %c0_19 = arith.constant 0 : index
    %24 = memref.load %arg8[%c0_19] : memref<1xf32, #tpu.memory_space<smem>>
    %25 = vector.broadcast %24 : f32 to vector<1x256xf32>
    %26 = arith.addf %23, %25 : vector<1x256xf32>
    %27 = arith.negf %26 : vector<1x256xf32>
    %28 = math.exp %27 : vector<1x256xf32>
    %cst_20 = arith.constant 1.000000e+00 : f32
    %29 = vector.broadcast %cst_20 : f32 to vector<1x256xf32>
    %30 = arith.addf %29, %28 : vector<1x256xf32>
    %31 = arith.divf %29, %30 : vector<1x256xf32>
    %32 = vector.shape_cast %31 : vector<1x256xf32> to vector<1x1x256xf32>
    %c0_21 = arith.constant 0 : index
    %c0_22 = arith.constant 0 : index
    %c0_23 = arith.constant 0 : index
    %33 = vector.load %arg9[%c0_21, %c0_22, %c0_23] : memref<1x1x256xf32, #tpu.memory_space<vmem>>, vector<1x1x256xf32>
    tpu.vector_store %arg9[%c0_21, %c0_22, %c0_23], %32 {strides = array<i32>} : memref<1x1x256xf32, #tpu.memory_space<vmem>>, vector<1x1x256xf32>,
    return
  }
  func.func @transform_0(%arg0: i32) -> (i32, i32) {
    %c0_i32 = arith.constant 0 : i32
    %c0_i32_0 = arith.constant 0 : i32
    return %c0_i32, %arg0 : i32, i32
  }
  func.func @transform_1(%arg0: i32) -> (i32, i32) {
    %c0_i32 = arith.constant 0 : i32
    %c0_i32_0 = arith.constant 0 : i32
    %c0_i32_1 = arith.constant 0 : i32
    return %c0_i32, %c0_i32_0 : i32, i32
  }
  func.func @transform_2(%arg0: i32) -> (i32, i32) {
    %c0_i32 = arith.constant 0 : i32
    %c0_i32_0 = arith.constant 0 : i32
    %c0_i32_1 = arith.constant 0 : i32
    return %c0_i32, %c0_i32_0 : i32, i32
  }
  func.func @transform_3(%arg0: i32) -> (i32, i32) {
    %c0_i32 = arith.constant 0 : i32
    %c0_i32_0 = arith.constant 0 : i32
    %c0_i32_1 = arith.constant 0 : i32
    return %c0_i32, %c0_i32_0 : i32, i32
  }
  func.func @transform_4(%arg0: i32) -> (i32, i32) {
    %c0_i32 = arith.constant 0 : i32
    %c0_i32_0 = arith.constant 0 : i32
    %c0_i32_1 = arith.constant 0 : i32
    return %c0_i32, %c0_i32_0 : i32, i32
  }
  func.func @transform_5(%arg0: i32) -> (i32, i32) {
    %c0_i32 = arith.constant 0 : i32
    %c0_i32_0 = arith.constant 0 : i32
    %c0_i32_1 = arith.constant 0 : i32
    return %c0_i32, %c0_i32_0 : i32, i32
  }
  func.func @transform_6(%arg0: i32) -> (i32, i32) {
    %c0_i32 = arith.constant 0 : i32
    %c0_i32_0 = arith.constant 0 : i32
    %c0_i32_1 = arith.constant 0 : i32
    return %c0_i32, %c0_i32_0 : i32, i32
  }
  func.func @transform_7(%arg0: i32) -> i32 {
    %c0_i32 = arith.constant 0 : i32
    %c0_i32_0 = arith.constant 0 : i32
    return %c0_i32 : i32
  }
  func.func @transform_8(%arg0: i32) -> (i32, i32, i32) {
    %c0_i32 = arith.constant 0 : i32
    %c0_i32_0 = arith.constant 0 : i32
    %c0_i32_1 = arith.constant 0 : i32
    return %arg0, %c0_i32, %c0_i32_0 : i32, i32, i32
  }
}

</mosaic_0001>

<llo_original>
// kernel: tpu_custom_call.1
$region0: #{tpu_custom_call.1}
  #allocation0 [shape = 'u32[]', space=smem, size = 0x4, offset = 0x4, fixed_abs, tag = 'smem constant byte address 0x4 - core index']
  #allocation1 [shape = 'u32[144,128]{1,0:T(1,128)}', space=vmem, size = 0x12000, scoped, tag = 'internal scratch']
  #allocation2 [shape = 'f32[1]{0:T(128)S(6)}', space=smem, size = 0x200, scoped, tag = 'scoped memory for tpu_custom_call.1']
  %s0 = inlined_call_operand.hbm [shape: f32[17,512], index: 0, kind: input, shape index: {}]
  %s1 = inlined_call_operand.vmem [shape: f32[256,17], index: 1, kind: input, shape index: {}]
  %s2 = inlined_call_operand.vmem [shape: f32[256,256], index: 2, kind: input, shape index: {}]
  %s3 = inlined_call_operand.vmem [shape: f32[256,1], index: 3, kind: input, shape index: {}]
  %s4 = inlined_call_operand.vmem [shape: f32[256,256], index: 4, kind: input, shape index: {}]
  %s5 = inlined_call_operand.vmem [shape: f32[256,1], index: 5, kind: input, shape index: {}]
  %s6 = inlined_call_operand.vmem [shape: f32[256,1], index: 6, kind: input, shape index: {}]
  %s7 = inlined_call_operand.<no memory space> [shape: f32[1], index: 7, kind: input, shape index: {}]
  %s8 = inlined_call_operand.hbm [shape: f32[2,1,256], index: 8, kind: output, shape index: {}]
  %s9 = sld [smem:[#allocation0]]
  $region69: #{tpu_custom_call.1} parent=0
    _
  %s11 = ssub.s32 1, %s9
  %s12 = scalar_select 0, %s11, %s9
  %13 = sst [smem:[#allocation2]] %s7
  $region1: #{tpu_custom_call.1} parent=0
    #allocation3 [shape = 'u8[49152]{0}', space=vmem, size = 0xc000, scoped, tag = 'input window, operand 0']
    #allocation4 [shape = 's32[2]{0}', space=sflag, size = 0x8, scoped, tag = 'scoped memory for tpu_custom_call.1']
    #allocation5 [shape = 's32[2]{0}', space=sflag, size = 0x8, scoped, tag = 'scoped memory for tpu_custom_call.1']
    #allocation6 [shape = 'u8[2048]{0}', space=vmem, size = 0x800, scoped, tag = 'output window, operand 0']
    %14 = vsyncpa [#allocation4], 0
    %s15 = scalar_lea.sflag [#allocation4], 1
    %16 = vsyncpa %s15, 0
    %17 = vsyncpa [#allocation5], 0
    %s18 = scalar_lea.sflag [#allocation5], 1
    %19 = vsyncpa %s18, 0
    loop: start=0, step=1, limit=4
    $region2: #{tpu_custom_call.1} parent=1 // loop_pre_header
      _
    $region3: #{tpu_custom_call.1} parent=1 // loop_header
      %s21 = sphi 0, %s25
      %p22 = scmp.ge.s32.totalorder %s21, 4
      %s31 = sphi 0, %s33
      %s34 = sphi 0, %s31
      %s35 = sphi 0, %s34
      %s51 = sphi 0, %s35
      %s55 = sphi 0, %s55
      %s57 = sphi 0, %s55
      %s58 = sphi 0, %s57
      %s72 = sphi 0, %s58
      %s76 = sphi 0, %s76
      %s78 = sphi 0, %s76
      %s79 = sphi 0, %s78
      %s93 = sphi 0, %s79
      %s97 = sphi 0, %s97
      %s99 = sphi 0, %s97
      %s100 = sphi 0, %s99
      %s114 = sphi 0, %s100
      %s118 = sphi 0, %s118
      %s120 = sphi 0, %s118
      %s121 = sphi 0, %s120
      %s135 = sphi 0, %s121
      %s139 = sphi 0, %s139
      %s141 = sphi 0, %s139
      %s142 = sphi 0, %s141
      %s156 = sphi 0, %s142
      %s160 = sphi 0, %s160
      %s162 = sphi 0, %s160
      %s163 = sphi 0, %s162
      %s177 = sphi 0, %s163
      %s181 = sphi 0, %s181
      %s183 = sphi 0, %s181
      %s184 = sphi 0, %s183
      %s198 = sphi 0, %s184
      %s204 = sphi 0, %s206
      %s207 = sphi 0, %s204
      %s208 = sphi 0, %s207
      %s224 = sphi 0, %s208
    $region4: #{tpu_custom_call.1} parent=1 // loop_header_branch
      %24 = sbr.rel (%p22) target = $region8
    $region5: #{tpu_custom_call.1} parent=1 // loop_body
      %s26 = ssub.s32 %s21, 1
      %s27 = ssub.s32 %s21, 2
      %s28 = sadd.s32 %s21, 1
      %s29 = ssub.s32 %s21, %s28
      %p30 = scmp.eq.s32.totalorder %s29, 0
      %s32 = sadd.s32 %s31, 1
      %s33 = scalar_select %p30, %s31, %s32
      %p36 = pneg %p30
      %p37 = scmp.eq.s32.totalorder %s21, 1
      %p38 = por %p36, %p37
      %p39 = scmp.ne.s32.totalorder %s31, %s34
      %p40 = scmp.eq.s32.totalorder %s21, 0
      %p41 = por %p39, %p40
      %p42 = scmp.ne.s32.totalorder %s31, %s34
      %p43 = scmp.eq.s32.totalorder %s26, 1
      %p44 = por %p42, %p43
      %p45 = scmp.ne.s32.totalorder %s34, %s35
      %p46 = scmp.eq.s32.totalorder %s26, 0
      %p47 = por %p45, %p46
      %p48 = scmp.ne.s32.totalorder %s34, %s35
      %p49 = scmp.eq.s32.totalorder %s27, 1
      %p50 = por %p48, %p49
      %p52 = scmp.ne.s32.totalorder %s35, %s51
      %p53 = scmp.eq.s32.totalorder %s27, 0
      %p54 = por %p52, %p53
      %s56 = sadd.s32 %s55, 1
      %p59 = scmp.eq.s32.totalorder %s21, 1
      %p60 = scmp.ne.s32.totalorder %s55, %s57
      %p61 = scmp.eq.s32.totalorder %s21, 0
      %p62 = por %p60, %p61
      %p63 = scmp.ne.s32.totalorder %s55, %s57
      %p64 = scmp.eq.s32.totalorder %s26, 1
      %p65 = por %p63, %p64
      %p66 = scmp.ne.s32.totalorder %s57, %s58
      %p67 = scmp.eq.s32.totalorder %s26, 0
      %p68 = por %p66, %p67
      %p69 = scmp.ne.s32.totalorder %s57, %s58
      %p70 = scmp.eq.s32.totalorder %s27, 1
      %p71 = por %p69, %p70
      %p73 = scmp.ne.s32.totalorder %s58, %s72
      %p74 = scmp.eq.s32.totalorder %s27, 0
      %p75 = por %p73, %p74
      %s77 = sadd.s32 %s76, 1
      %p80 = scmp.eq.s32.totalorder %s21, 1
      %p81 = scmp.ne.s32.totalorder %s76, %s78
      %p82 = scmp.eq.s32.totalorder %s21, 0
      %p83 = por %p81, %p82
      %p84 = scmp.ne.s32.totalorder %s76, %s78
      %p85 = scmp.eq.s32.totalorder %s26, 1
      %p86 = por %p84, %p85
      %p87 = scmp.ne.s32.totalorder %s78, %s79
      %p88 = scmp.eq.s32.totalorder %s26, 0
      %p89 = por %p87, %p88
      %p90 = scmp.ne.s32.totalorder %s78, %s79
      %p91 = scmp.eq.s32.totalorder %s27, 1
      %p92 = por %p90, %p91
      %p94 = scmp.ne.s32.totalorder %s79, %s93
      %p95 = scmp.eq.s32.totalorder %s27, 0
      %p96 = por %p94, %p95
      %s98 = sadd.s32 %s97, 1
      %p101 = scmp.eq.s32.totalorder %s21, 1
      %p102 = scmp.ne.s32.totalorder %s97, %s99
      %p103 = scmp.eq.s32.totalorder %s21, 0
      %p104 = por %p102, %p103
      %p105 = scmp.ne.s32.totalorder %s97, %s99
      %p106 = scmp.eq.s32.totalorder %s26, 1
      %p107 = por %p105, %p106
      %p108 = scmp.ne.s32.totalorder %s99, %s100
      %p109 = scmp.eq.s32.totalorder %s26, 0
      %p110 = por %p108, %p109
      %p111 = scmp.ne.s32.totalorder %s99, %s100
      %p112 = scmp.eq.s32.totalorder %s27, 1
      %p113 = por %p111, %p112
      %p115 = scmp.ne.s32.totalorder %s100, %s114
      %p116 = scmp.eq.s32.totalorder %s27, 0
      %p117 = por %p115, %p116
      %s119 = sadd.s32 %s118, 1
      %p122 = scmp.eq.s32.totalorder %s21, 1
      %p123 = scmp.ne.s32.totalorder %s118, %s120
      %p124 = scmp.eq.s32.totalorder %s21, 0
      %p125 = por %p123, %p124
      %p126 = scmp.ne.s32.totalorder %s118, %s120
      %p127 = scmp.eq.s32.totalorder %s26, 1
      %p128 = por %p126, %p127
      %p129 = scmp.ne.s32.totalorder %s120, %s121
      %p130 = scmp.eq.s32.totalorder %s26, 0
      %p131 = por %p129, %p130
      %p132 = scmp.ne.s32.totalorder %s120, %s121
      %p133 = scmp.eq.s32.totalorder %s27, 1
      %p134 = por %p132, %p133
      %p136 = scmp.ne.s32.totalorder %s121, %s135
      %p137 = scmp.eq.s32.totalorder %s27, 0
      %p138 = por %p136, %p137
      %s140 = sadd.s32 %s139, 1
      %p143 = scmp.eq.s32.totalorder %s21, 1
      %p144 = scmp.ne.s32.totalorder %s139, %s141
      %p145 = scmp.eq.s32.totalorder %s21, 0
      %p146 = por %p144, %p145
      %p147 = scmp.ne.s32.totalorder %s139, %s141
      %p148 = scmp.eq.s32.totalorder %s26, 1
      %p149 = por %p147, %p148
      %p150 = scmp.ne.s32.totalorder %s141, %s142
      %p151 = scmp.eq.s32.totalorder %s26, 0
      %p152 = por %p150, %p151
      %p153 = scmp.ne.s32.totalorder %s141, %s142
      %p154 = scmp.eq.s32.totalorder %s27, 1
      %p155 = por %p153, %p154
      %p157 = scmp.ne.s32.totalorder %s142, %s156
      %p158 = scmp.eq.s32.totalorder %s27, 0
      %p159 = por %p157, %p158
      %s161 = sadd.s32 %s160, 1
      %p164 = scmp.eq.s32.totalorder %s21, 1
      %p165 = scmp.ne.s32.totalorder %s160, %s162
      %p166 = scmp.eq.s32.totalorder %s21, 0
      %p167 = por %p165, %p166
      %p168 = scmp.ne.s32.totalorder %s160, %s162
      %p169 = scmp.eq.s32.totalorder %s26, 1
      %p170 = por %p168, %p169
      %p171 = scmp.ne.s32.totalorder %s162, %s163
      %p172 = scmp.eq.s32.totalorder %s26, 0
      %p173 = por %p171, %p172
      %p174 = scmp.ne.s32.totalorder %s162, %s163
      %p175 = scmp.eq.s32.totalorder %s27, 1
      %p176 = por %p174, %p175
      %p178 = scmp.ne.s32.totalorder %s163, %s177
      %p179 = scmp.eq.s32.totalorder %s27, 0
      %p180 = por %p178, %p179
      %s182 = sadd.s32 %s181, 1
      %p185 = scmp.eq.s32.totalorder %s21, 1
      %p186 = scmp.ne.s32.totalorder %s181, %s183
      %p187 = scmp.eq.s32.totalorder %s21, 0
      %p188 = por %p186, %p187
      %p189 = scmp.ne.s32.totalorder %s181, %s183
      %p190 = scmp.eq.s32.totalorder %s26, 1
      %p191 = por %p189, %p190
      %p192 = scmp.ne.s32.totalorder %s183, %s184
      %p193 = scmp.eq.s32.totalorder %s26, 0
      %p194 = por %p192, %p193
      %p195 = scmp.ne.s32.totalorder %s183, %s184
      %p196 = scmp.eq.s32.totalorder %s27, 1
      %p197 = por %p195, %p196
      %p199 = scmp.ne.s32.totalorder %s184, %s198
      %p200 = scmp.eq.s32.totalorder %s27, 0
      %p201 = por %p199, %p200
      %s202 = ssub.s32 %s21, %s28
      %p203 = scmp.eq.s32.totalorder %s202, 0
      %s205 = sadd.s32 %s204, 1
      %s206 = scalar_select %p203, %s204, %s205
      %p209 = pneg %p203
      %p210 = scmp.eq.s32.totalorder %s21, 1
      %p211 = por %p209, %p210
      %p212 = scmp.ne.s32.totalorder %s204, %s207
      %p213 = scmp.eq.s32.totalorder %s21, 0
      %p214 = por %p212, %p213
      %p215 = scmp.ne.s32.totalorder %s204, %s207
      %p216 = scmp.eq.s32.totalorder %s26, 1
      %p217 = por %p215, %p216
      %p218 = scmp.ne.s32.totalorder %s207, %s208
      %p219 = scmp.eq.s32.totalorder %s26, 0
      %p220 = por %p218, %p219
      %p221 = scmp.ne.s32.totalorder %s207, %s208
      %p222 = scmp.eq.s32.totalorder %s27, 1
      %p223 = por %p221, %p222
      %p225 = scmp.ne.s32.totalorder %s208, %s224
      %p226 = scmp.eq.s32.totalorder %s27, 0
      %p227 = por %p225, %p226
      %p228 = scmp.le.s32.totalorder 1, %s21
      %p229 = scmp.lt.s32.totalorder %s21, 3
      %p230 = pnand %p228, %p229
      %p231 = pneg %p230
      // Predicated region
      $region9: #{tpu_custom_call.1} parent=5 // pred_check
        _
      $region10: #{tpu_custom_call.1} parent=5 // pred_check_branch
        %233 = sbr.rel (%p230) target = $region12
      $region11: #{tpu_custom_call.1} parent=5 // pred_region
        %s234 = ssub.s32 %s21, 1
        // Predicated region
        $region13: #{tpu_custom_call.1} parent=11 // pred_check
          %p235 = pneg %p68
        $region14: #{tpu_custom_call.1} parent=11 // pred_check_branch
          %237 = sbr.rel (%p235) target = $region16
        $region15: #{tpu_custom_call.1} parent=11 // pred_region
          _
        $region16: #{tpu_custom_call.1} parent=11 // pred_fallthru
          _
        // Predicated region
        $region17: #{tpu_custom_call.1} parent=11 // pred_check
          %p238 = pneg %p89
        $region18: #{tpu_custom_call.1} parent=11 // pred_check_branch
          %240 = sbr.rel (%p238) target = $region20
        $region19: #{tpu_custom_call.1} parent=11 // pred_region
          _
        $region20: #{tpu_custom_call.1} parent=11 // pred_fallthru
          _
        // Predicated region
        $region21: #{tpu_custom_call.1} parent=11 // pred_check
          %p241 = pneg %p110
        $region22: #{tpu_custom_call.1} parent=11 // pred_check_branch
          %243 = sbr.rel (%p241) target = $region24
        $region23: #{tpu_custom_call.1} parent=11 // pred_region
          _
        $region24: #{tpu_custom_call.1} parent=11 // pred_fallthru
          _
        // Predicated region
        $region25: #{tpu_custom_call.1} parent=11 // pred_check
          %p244 = pneg %p131
        $region26: #{tpu_custom_call.1} parent=11 // pred_check_branch
          %246 = sbr.rel (%p244) target = $region28
        $region27: #{tpu_custom_call.1} parent=11 // pred_region
          _
        $region28: #{tpu_custom_call.1} parent=11 // pred_fallthru
          _
        // Predicated region
        $region29: #{tpu_custom_call.1} parent=11 // pred_check
          %p247 = pneg %p152
        $region30: #{tpu_custom_call.1} parent=11 // pred_check_branch
          %249 = sbr.rel (%p247) target = $region32
        $region31: #{tpu_custom_call.1} parent=11 // pred_region
          _
        $region32: #{tpu_custom_call.1} parent=11 // pred_fallthru
          _
        // Predicated region
        $region33: #{tpu_custom_call.1} parent=11 // pred_check
          %p250 = pneg %p173
        $region34: #{tpu_custom_call.1} parent=11 // pred_check_branch
          %252 = sbr.rel (%p250) target = $region36
        $region35: #{tpu_custom_call.1} parent=11 // pred_region
          _
        $region36: #{tpu_custom_call.1} parent=11 // pred_fallthru
          _
        // Predicated region
        $region37: #{tpu_custom_call.1} parent=11 // pred_check
          %p253 = pneg %p194
        $region38: #{tpu_custom_call.1} parent=11 // pred_check_branch
          %255 = sbr.rel (%p253) target = $region40
        $region39: #{tpu_custom_call.1} parent=11 // pred_region
          _
        $region40: #{tpu_custom_call.1} parent=11 // pred_fallthru
          _
      $region12: #{tpu_custom_call.1} parent=5 // pred_fallthru
        _
      %p256 = scmp.lt.s32.totalorder %s21, 2
      // Predicated region
      $region41: #{tpu_custom_call.1} parent=5 // pred_check
        %p257 = pneg %p256
      $region42: #{tpu_custom_call.1} parent=5 // pred_check_branch
        %259 = sbr.rel (%p257) target = $region44
      $region43: #{tpu_custom_call.1} parent=5 // pred_region
        // Predicated region
        $region45: #{tpu_custom_call.1} parent=43 // pred_check
          %p260 = pneg %p41
        $region46: #{tpu_custom_call.1} parent=43 // pred_check_branch
          %262 = sbr.rel (%p260) target = $region48
        $region47: #{tpu_custom_call.1} parent=43 // pred_region
          %s263 = sand.u32 %s31, 1
          %s264 = scalar_lea.sflag [#allocation4], %s263
          %s265 = sand.u32 %s31, 1
          %s266 = smul.addr %s265, 48
          %s267 = scalar_lea.vmem [#allocation3], %s266
          %s268 = smul.u32 2, %s21
          %s270 = ssub.s32 768, 768
          %271 = vsyncadd %s264, %s270
          %s272 = smul.addr %s268, 128
          %s273 = scalar_lea.hbm %s0, %s272
          %s274 = sshll.u32 %s267, 4
          %s275 = int_to_ptr.vmem [resolvable:$true] %s274
          %280 = dma.hbm_to_vmem [thread:$0]  %s273, 768, %s275, %s264, 512, 256, 16
        $region48: #{tpu_custom_call.1} parent=43 // pred_fallthru
          _
      $region44: #{tpu_custom_call.1} parent=5 // pred_fallthru
        _
      %p281 = scmp.le.s32.totalorder 1, %s21
      %p282 = scmp.lt.s32.totalorder %s21, 3
      %p283 = pnand %p281, %p282
      %p284 = pneg %p283
      // Predicated region
      $region49: #{tpu_custom_call.1} parent=5 // pred_check
        _
      $region50: #{tpu_custom_call.1} parent=5 // pred_check_branch
        %286 = sbr.rel (%p283) target = $region52
      $region51: #{tpu_custom_call.1} parent=5 // pred_region
        %s287 = ssub.s32 %s21, 1
        %s288 = sand.u32 %s34, 1
        %s289 = scalar_lea.sflag [#allocation4], %s288
        %s290 = sand.u32 %s34, 1
        %s291 = smul.addr %s290, 48
        %s292 = scalar_lea.vmem [#allocation3], %s291
        // Predicated region
        $region53: #{tpu_custom_call.1} parent=51 // pred_check
          %p293 = pneg %p47
        $region54: #{tpu_custom_call.1} parent=51 // pred_check_branch
          %295 = sbr.rel (%p293) target = $region56
        $region55: #{tpu_custom_call.1} parent=51 // pred_region
          %296 = dma.done %s289, 768
        $region56: #{tpu_custom_call.1} parent=51 // pred_fallthru
          _
        %s297 = sand.u32 %s34, 1
        %s298 = scalar_lea.sflag [#allocation4], %s297
        %s299 = sand.u32 %s34, 1
        %s300 = smul.addr %s299, 48
        %s301 = scalar_lea.vmem [#allocation3], %s300
        %p302 = pneg %p47
        %p303 = pneg %p44
        %p304 = pneg %p68
        %p305 = pneg %p65
        %p306 = pneg %p89
        %p307 = pneg %p86
        %p308 = pneg %p110
        %p309 = pneg %p107
        %p310 = pneg %p131
        %p311 = pneg %p128
        %p312 = pneg %p152
        %p313 = pneg %p149
        %p314 = pneg %p173
        %p315 = pneg %p170
        %p316 = pneg %p194
        %p317 = pneg %p191
        %p318 = pneg %p220
        %p319 = pneg %p217
        %s320 = sand.u32 %s207, 1
        %s321 = scalar_lea.sflag [#allocation5], %s320
        %s322 = sand.u32 %s207, 1
        %s323 = smul.addr %s322, 2
        %s324 = scalar_lea.vmem [#allocation6], %s323
        %s325 = smul.u32 2, %s26
        %v326 = vld [vmem:[%s1] sm:$0xff]
        %v327 = vld [vmem:[%s1 + $0x8] sm:$0xff]
        %v328 = vld [vmem:[%s1 + $0x10] sm:$0xff]
        %v329 = vld [vmem:[%s1 + $0x18] sm:$0xff]
        %v330 = vld [vmem:[%s1 + $0x20] sm:$0xff]
        %v331 = vld [vmem:[%s1 + $0x28] sm:$0xff]
        %v332 = vld [vmem:[%s1 + $0x30] sm:$0xff]
        %v333 = vld [vmem:[%s1 + $0x38] sm:$0xff]
        %v334 = vld [vmem:[%s1 + $0x40] sm:$0xff]
        %v335 = vld [vmem:[%s1 + $0x48] sm:$0xff]
        %v336 = vld [vmem:[%s1 + $0x50] sm:$0xff]
        %v337 = vld [vmem:[%s1 + $0x58] sm:$0xff]
        %v338 = vld [vmem:[%s1 + $0x60] sm:$0xff]
        %v339 = vld [vmem:[%s1 + $0x68] sm:$0xff]
        %v340 = vld [vmem:[%s1 + $0x70] sm:$0xff]
        %v341 = vld [vmem:[%s1 + $0x78] sm:$0xff]
        %v342 = vld [vmem:[%s1 + $0x80] sm:$0xff]
        %v343 = vld [vmem:[%s1 + $0x88] sm:$0xff]
        %v344 = vld [vmem:[%s1 + $0x90] sm:$0xff]
        %v345 = vld [vmem:[%s1 + $0x98] sm:$0xff]
        %v346 = vld [vmem:[%s1 + $0xa0] sm:$0xff]
        %v347 = vld [vmem:[%s1 + $0xa8] sm:$0xff]
        %v348 = vld [vmem:[%s1 + $0xb0] sm:$0xff]
        %v349 = vld [vmem:[%s1 + $0xb8] sm:$0xff]
        %v350 = vld [vmem:[%s1 + $0xc0] sm:$0xff]
        %v351 = vld [vmem:[%s1 + $0xc8] sm:$0xff]
        %v352 = vld [vmem:[%s1 + $0xd0] sm:$0xff]
        %v353 = vld [vmem:[%s1 + $0xd8] sm:$0xff]
        %v354 = vld [vmem:[%s1 + $0xe0] sm:$0xff]
        %v355 = vld [vmem:[%s1 + $0xe8] sm:$0xff]
        %v356 = vld [vmem:[%s1 + $0xf0] sm:$0xff]
        %v357 = vld [vmem:[%s1 + $0xf8] sm:$0xff]
        %v358 = vld [vmem:[%s292] sm:$0xff]
        %v359 = vld [vmem:[%s292 + $0x8] sm:$0xff]
        %v360 = vld [vmem:[%s292 + $0x10] sm:$0xff]
        %v361 = vld [vmem:[%s292 + $0x18] sm:$0xff]
        %v362 = vld [vmem:[%s292 + $0x20] sm:$0x1]
        %v363 = vld [vmem:[%s292 + $0x28] sm:$0x1]
        %vm364 = vcmask 138240
        %v366 = vsel %vm364, %v326, 0
        %v369 = vsel %vm364, %v327, 0
        %v372 = vsel %vm364, %v328, 0
        %v375 = vsel %vm364, %v329, 0
        %v378 = vsel %vm364, %v330, 0
        %v381 = vsel %vm364, %v331, 0
        %v384 = vsel %vm364, %v332, 0
        %v387 = vsel %vm364, %v333, 0
        %v390 = vsel %vm364, %v334, 0
        %v393 = vsel %vm364, %v335, 0
        %v396 = vsel %vm364, %v336, 0
        %v399 = vsel %vm364, %v337, 0
        %v402 = vsel %vm364, %v338, 0
        %v405 = vsel %vm364, %v339, 0
        %v408 = vsel %vm364, %v340, 0
        %v411 = vsel %vm364, %v341, 0
        %v414 = vsel %vm364, %v342, 0
        %v417 = vsel %vm364, %v343, 0
        %v420 = vsel %vm364, %v344, 0
        %v423 = vsel %vm364, %v345, 0
        %v426 = vsel %vm364, %v346, 0
        %v429 = vsel %vm364, %v347, 0
        %v432 = vsel %vm364, %v348, 0
        %v435 = vsel %vm364, %v349, 0
        %v438 = vsel %vm364, %v350, 0
        %v441 = vsel %vm364, %v351, 0
        %v444 = vsel %vm364, %v352, 0
        %v447 = vsel %vm364, %v353, 0
        %v450 = vsel %vm364, %v354, 0
        %v453 = vsel %vm364, %v355, 0
        %v456 = vsel %vm364, %v356, 0
        %v459 = vsel %vm364, %v357, 0
        %vm461 = vcmask 1040384
        %v463 = vsel %vm461, %v362, 0
        %v466 = vsel %vm461, %v363, 0
        %468 = vmatprep.subr.mxu0 %v359
        %469 = vmatpush1.msra.mxu0 %v358
        %470 = vmatprep.subr.mxu0 %v361
        %471 = vmatpush1.msra.mxu0 %v360
        %472 = vmatprep.subr.mxu0 %v466
        %473 = vmatpush1.msra.mxu0 %v463
        %474 = vmatprep.subr.mxu0 0.0
        %475 = vmatpush1.msra.mxu0 0.0
        %476 = vmatprep.subr.mxu0 0.0
        %477 = vmatpush1.msra.mxu0 0.0
        %478 = vmatprep.subr.mxu0 0.0
        %479 = vmatpush1.msra.mxu0 0.0
        %480 = vmatprep.subr.mxu0 0.0
        %481 = vmatpush1.msra.mxu0 0.0
        %482 = vmatprep.subr.mxu0 0.0
        %483 = vmatpush1.msra.mxu0 0.0
        %484 = vmatprep.subr.mxu0 0.0
        %485 = vmatpush1.msra.mxu0 0.0
        %486 = vmatprep.subr.mxu0 0.0
        %487 = vmatpush1.msra.mxu0 0.0
        %488 = vmatprep.subr.mxu0 0.0
        %489 = vmatpush1.msra.mxu0 0.0
        %490 = vmatprep.subr.mxu0 0.0
        %491 = vmatpush1.msra.mxu0 0.0
        %492 = vmatprep.subr.mxu0 0.0
        %493 = vmatpush1.msra.mxu0 0.0
        %494 = vmatprep.subr.mxu0 0.0
        %495 = vmatpush1.msra.mxu0 0.0
        %496 = vmatprep.subr.mxu0 0.0
        %497 = vmatpush1.msra.mxu0 0.0
        %498 = vmatprep.subr.mxu0 0.0
        %499 = vmatpush1.msra.mxu0 0.0
        %500 = vmatprep.subr.mxu0 0.0
        %501 = vmatpush1.msra.mxu0 0.0
        %502 = vmatprep.subr.mxu0 0.0
        %503 = vmatpush1.msra.mxu0 0.0
        %504 = vmatprep.subr.mxu0 0.0
        %505 = vmatpush1.msra.mxu0 0.0
        %506 = vmatprep.subr.mxu0 0.0
        %507 = vmatpush1.msra.mxu0 0.0
        %508 = vmatprep.subr.mxu0 0.0
        %509 = vmatpush1.msra.mxu0 0.0
        %510 = vmatprep.subr.mxu0 0.0
        %511 = vmatpush1.msra.mxu0 0.0
        %512 = vmatprep.subr.mxu0 0.0
        %513 = vmatpush1.msra.mxu0 0.0
        %514 = vmatprep.subr.mxu0 0.0
        %515 = vmatpush1.msra.mxu0 0.0
        %516 = vmatprep.subr.mxu0 0.0
        %517 = vmatpush1.msra.mxu0 0.0
        %518 = vmatprep.subr.mxu0 0.0
        %519 = vmatpush1.msra.mxu0 0.0
        %520 = vmatprep.subr.mxu0 0.0
        %521 = vmatpush1.msra.mxu0 0.0
        %522 = vmatprep.subr.mxu0 0.0
        %523 = vmatpush1.msra.mxu0 0.0
        %524 = vmatprep.subr.mxu0 0.0
        %525 = vmatpush1.msra.mxu0 0.0
        %526 = vmatprep.subr.mxu0 0.0
        %527 = vmatpush1.msra.mxu0 0.0
        %528 = vmatprep.subr.mxu0 0.0
        %529 = vmatpush1.msra.mxu0 0.0
        %530 = vmatprep.subr.mxu0 0.0
        %531 = vmatpush1.msra.mxu0 0.0
        %532 = vmatprep.mubr.f32.mxu0 0.0
        %533 = vmatmul.mubr.f32.gmra.mrb[0].mxu0 %v366
        %v534 = vpop.f32.mrb[0].mxu0
        %v535 = vadd.f32 0.0, %v534
        %v536 = vpop.f32.mrb[0].mxu0
        %v537 = vadd.f32 0.0, %v536
        %538 = vmatprep.mubr.f32.mxu0 0.0
        %539 = vmatmul.mubr.f32.gmra.mrb[0].mxu0 %v369
        %v540 = vpop.f32.mrb[0].mxu0
        %v541 = vadd.f32 0.0, %v540
        %v542 = vpop.f32.mrb[0].mxu0
        %v543 = vadd.f32 0.0, %v542
        %544 = vmatprep.mubr.f32.mxu0 0.0
        %545 = vmatmul.mubr.f32.gmra.mrb[0].mxu0 %v372
        %v546 = vpop.f32.mrb[0].mxu0
        %v547 = vadd.f32 0.0, %v546
        %v548 = vpop.f32.mrb[0].mxu0
        %v549 = vadd.f32 0.0, %v548
        %550 = vmatprep.mubr.f32.mxu0 0.0
        %551 = vmatmul.mubr.f32.gmra.mrb[0].mxu0 %v375
        %v552 = vpop.f32.mrb[0].mxu0
        %v553 = vadd.f32 0.0, %v552
        %v554 = vpop.f32.mrb[0].mxu0
        %v555 = vadd.f32 0.0, %v554
        %556 = vmatprep.mubr.f32.mxu0 0.0
        %557 = vmatmul.mubr.f32.gmra.mrb[0].mxu0 %v378
        %v558 = vpop.f32.mrb[0].mxu0
        %v559 = vadd.f32 0.0, %v558
        %v560 = vpop.f32.mrb[0].mxu0
        %v561 = vadd.f32 0.0, %v560
        %562 = vmatprep.mubr.f32.mxu0 0.0
        %563 = vmatmul.mubr.f32.gmra.mrb[0].mxu0 %v381
        %v564 = vpop.f32.mrb[0].mxu0
        %v565 = vadd.f32 0.0, %v564
        %v566 = vpop.f32.mrb[0].mxu0
        %v567 = vadd.f32 0.0, %v566
        %568 = vmatprep.mubr.f32.mxu0 0.0
        %569 = vmatmul.mubr.f32.gmra.mrb[0].mxu0 %v384
        %v570 = vpop.f32.mrb[0].mxu0
        %v571 = vadd.f32 0.0, %v570
        %v572 = vpop.f32.mrb[0].mxu0
        %v573 = vadd.f32 0.0, %v572
        %574 = vmatprep.mubr.f32.mxu0 0.0
        %575 = vmatmul.mubr.f32.gmra.mrb[0].mxu0 %v387
        %v576 = vpop.f32.mrb[0].mxu0
        %v577 = vadd.f32 0.0, %v576
        %v578 = vpop.f32.mrb[0].mxu0
        %v579 = vadd.f32 0.0, %v578
        %580 = vmatprep.mubr.f32.mxu0 0.0
        %581 = vmatmul.mubr.f32.gmra.mrb[0].mxu0 %v390
        %v582 = vpop.f32.mrb[0].mxu0
        %v583 = vadd.f32 0.0, %v582
        %v584 = vpop.f32.mrb[0].mxu0
        %v585 = vadd.f32 0.0, %v584
        %586 = vmatprep.mubr.f32.mxu0 0.0
        %587 = vmatmul.mubr.f32.gmra.mrb[0].mxu0 %v393
        %v588 = vpop.f32.mrb[0].mxu0
        %v589 = vadd.f32 0.0, %v588
        %v590 = vpop.f32.mrb[0].mxu0
        %v591 = vadd.f32 0.0, %v590
        %592 = vmatprep.mubr.f32.mxu0 0.0
        %593 = vmatmul.mubr.f32.gmra.mrb[0].mxu0 %v396
        %v594 = vpop.f32.mrb[0].mxu0
        %v595 = vadd.f32 0.0, %v594
        %v596 = vpop.f32.mrb[0].mxu0
        %v597 = vadd.f32 0.0, %v596
        %598 = vmatprep.mubr.f32.mxu0 0.0
        %599 = vmatmul.mubr.f32.gmra.mrb[0].mxu0 %v399
        %v600 = vpop.f32.mrb[0].mxu0
        %v601 = vadd.f32 0.0, %v600
        %v602 = vpop.f32.mrb[0].mxu0
        %v603 = vadd.f32 0.0, %v602
        %604 = vmatprep.mubr.f32.mxu0 0.0
        %605 = vmatmul.mubr.f32.gmra.mrb[0].mxu0 %v402
        %v606 = vpop.f32.mrb[0].mxu0
        %v607 = vadd.f32 0.0, %v606
        %v608 = vpop.f32.mrb[0].mxu0
        %v609 = vadd.f32 0.0, %v608
        %610 = vmatprep.mubr.f32.mxu0 0.0
        %611 = vmatmul.mubr.f32.gmra.mrb[0].mxu0 %v405
        %v612 = vpop.f32.mrb[0].mxu0
        %v613 = vadd.f32 0.0, %v612
        %v614 = vpop.f32.mrb[0].mxu0
        %v615 = vadd.f32 0.0, %v614
        %616 = vmatprep.mubr.f32.mxu0 0.0
        %617 = vmatmul.mubr.f32.gmra.mrb[0].mxu0 %v408
        %v618 = vpop.f32.mrb[0].mxu0
        %v619 = vadd.f32 0.0, %v618
        %v620 = vpop.f32.mrb[0].mxu0
        %v621 = vadd.f32 0.0, %v620
        %622 = vmatprep.mubr.f32.mxu0 0.0
        %623 = vmatmul.mubr.f32.gmra.mrb[0].mxu0 %v411
        %v624 = vpop.f32.mrb[0].mxu0
        %v625 = vadd.f32 0.0, %v624
        %v626 = vpop.f32.mrb[0].mxu0
        %v627 = vadd.f32 0.0, %v626
        %628 = vmatprep.mubr.f32.mxu0 0.0
        %629 = vmatmul.mubr.f32.gmra.mrb[0].mxu0 %v414
        %v630 = vpop.f32.mrb[0].mxu0
        %v631 = vadd.f32 0.0, %v630
        %v632 = vpop.f32.mrb[0].mxu0
        %v633 = vadd.f32 0.0, %v632
        %634 = vmatprep.mubr.f32.mxu0 0.0
        %635 = vmatmul.mubr.f32.gmra.mrb[0].mxu0 %v417
        %v636 = vpop.f32.mrb[0].mxu0
        %v637 = vadd.f32 0.0, %v636
        %v638 = vpop.f32.mrb[0].mxu0
        %v639 = vadd.f32 0.0, %v638
        %640 = vmatprep.mubr.f32.mxu0 0.0
        %641 = vmatmul.mubr.f32.gmra.mrb[0].mxu0 %v420
        %v642 = vpop.f32.mrb[0].mxu0
        %v643 = vadd.f32 0.0, %v642
        %v644 = vpop.f32.mrb[0].mxu0
        %v645 = vadd.f32 0.0, %v644
        %646 = vmatprep.mubr.f32.mxu0 0.0
        %647 = vmatmul.mubr.f32.gmra.mrb[0].mxu0 %v423
        %v648 = vpop.f32.mrb[0].mxu0
        %v649 = vadd.f32 0.0, %v648
        %v650 = vpop.f32.mrb[0].mxu0
        %v651 = vadd.f32 0.0, %v650
        %652 = vmatprep.mubr.f32.mxu0 0.0
        %653 = vmatmul.mubr.f32.gmra.mrb[0].mxu0 %v426
        %v654 = vpop.f32.mrb[0].mxu0
        %v655 = vadd.f32 0.0, %v654
        %v656 = vpop.f32.mrb[0].mxu0
        %v657 = vadd.f32 0.0, %v656
        %658 = vmatprep.mubr.f32.mxu0 0.0
        %659 = vmatmul.mubr.f32.gmra.mrb[0].mxu0 %v429
        %v660 = vpop.f32.mrb[0].mxu0
        %v661 = vadd.f32 0.0, %v660
        %v662 = vpop.f32.mrb[0].mxu0
        %v663 = vadd.f32 0.0, %v662
        %664 = vmatprep.mubr.f32.mxu0 0.0
        %665 = vmatmul.mubr.f32.gmra.mrb[0].mxu0 %v432
        %v666 = vpop.f32.mrb[0].mxu0
        %v667 = vadd.f32 0.0, %v666
        %v668 = vpop.f32.mrb[0].mxu0
        %v669 = vadd.f32 0.0, %v668
        %670 = vmatprep.mubr.f32.mxu0 0.0
        %671 = vmatmul.mubr.f32.gmra.mrb[0].mxu0 %v435
        %v672 = vpop.f32.mrb[0].mxu0
        %v673 = vadd.f32 0.0, %v672
        %v674 = vpop.f32.mrb[0].mxu0
        %v675 = vadd.f32 0.0, %v674
        %676 = vmatprep.mubr.f32.mxu0 0.0
        %677 = vmatmul.mubr.f32.gmra.mrb[0].mxu0 %v438
        %v678 = vpop.f32.mrb[0].mxu0
        %v679 = vadd.f32 0.0, %v678
        %v680 = vpop.f32.mrb[0].mxu0
        %v681 = vadd.f32 0.0, %v680
        %682 = vmatprep.mubr.f32.mxu0 0.0
        %683 = vmatmul.mubr.f32.gmra.mrb[0].mxu0 %v441
        %v684 = vpop.f32.mrb[0].mxu0
        %v685 = vadd.f32 0.0, %v684
        %v686 = vpop.f32.mrb[0].mxu0
        %v687 = vadd.f32 0.0, %v686
        %688 = vmatprep.mubr.f32.mxu0 0.0
        %689 = vmatmul.mubr.f32.gmra.mrb[0].mxu0 %v444
        %v690 = vpop.f32.mrb[0].mxu0
        %v691 = vadd.f32 0.0, %v690
        %v692 = vpop.f32.mrb[0].mxu0
        %v693 = vadd.f32 0.0, %v692
        %694 = vmatprep.mubr.f32.mxu0 0.0
        %695 = vmatmul.mubr.f32.gmra.mrb[0].mxu0 %v447
        %v696 = vpop.f32.mrb[0].mxu0
        %v697 = vadd.f32 0.0, %v696
        %v698 = vpop.f32.mrb[0].mxu0
        %v699 = vadd.f32 0.0, %v698
        %700 = vmatprep.mubr.f32.mxu0 0.0
        %701 = vmatmul.mubr.f32.gmra.mrb[0].mxu0 %v450
        %v702 = vpop.f32.mrb[0].mxu0
        %v703 = vadd.f32 0.0, %v702
        %v704 = vpop.f32.mrb[0].mxu0
        %v705 = vadd.f32 0.0, %v704
        %706 = vmatprep.mubr.f32.mxu0 0.0
        %707 = vmatmul.mubr.f32.gmra.mrb[0].mxu0 %v453
        %v708 = vpop.f32.mrb[0].mxu0
        %v709 = vadd.f32 0.0, %v708
        %v710 = vpop.f32.mrb[0].mxu0
        %v711 = vadd.f32 0.0, %v710
        %712 = vmatprep.mubr.f32.mxu0 0.0
        %713 = vmatmul.mubr.f32.gmra.mrb[0].mxu0 %v456
        %v714 = vpop.f32.mrb[0].mxu0
        %v715 = vadd.f32 0.0, %v714
        %v716 = vpop.f32.mrb[0].mxu0
        %v717 = vadd.f32 0.0, %v716
        %718 = vmatprep.mubr.f32.mxu0 0.0
        %719 = vmatmul.mubr.f32.gmra.mrb[0].mxu0 %v459
        %v720 = vpop.f32.mrb[0].mxu0
        %v721 = vadd.f32 0.0, %v720
        %v722 = vpop.f32.mrb[0].mxu0
        %v723 = vadd.f32 0.0, %v722
        %724 = vdwg.mxu0
        %v725 = vmax.f32 %v535, 0.0
        %v726 = vmax.f32 %v537, 0.0
        %v727 = vmax.f32 %v541, 0.0
        %v728 = vmax.f32 %v543, 0.0
        %v729 = vmax.f32 %v547, 0.0
        %v730 = vmax.f32 %v549, 0.0
        %v731 = vmax.f32 %v553, 0.0
        %v732 = vmax.f32 %v555, 0.0
        %v733 = vmax.f32 %v559, 0.0
        %v734 = vmax.f32 %v561, 0.0
        %v735 = vmax.f32 %v565, 0.0
        %v736 = vmax.f32 %v567, 0.0
        %v737 = vmax.f32 %v571, 0.0
        %v738 = vmax.f32 %v573, 0.0
        %v739 = vmax.f32 %v577, 0.0
        %v740 = vmax.f32 %v579, 0.0
        %v741 = vmax.f32 %v583, 0.0
        %v742 = vmax.f32 %v585, 0.0
        %v743 = vmax.f32 %v589, 0.0
        %v744 = vmax.f32 %v591, 0.0
        %v745 = vmax.f32 %v595, 0.0
        %v746 = vmax.f32 %v597, 0.0
        %v747 = vmax.f32 %v601, 0.0
        %v748 = vmax.f32 %v603, 0.0
        %v749 = vmax.f32 %v607, 0.0
        %v750 = vmax.f32 %v609, 0.0
        %v751 = vmax.f32 %v613, 0.0
        %v752 = vmax.f32 %v615, 0.0
        %v753 = vmax.f32 %v619, 0.0
        %v754 = vmax.f32 %v621, 0.0
        %v755 = vmax.f32 %v625, 0.0
        %v756 = vmax.f32 %v627, 0.0
        %v757 = vmax.f32 %v631, 0.0
        %v758 = vmax.f32 %v633, 0.0
        %v759 = vmax.f32 %v637, 0.0
        %v760 = vmax.f32 %v639, 0.0
        %v761 = vmax.f32 %v643, 0.0
        %v762 = vmax.f32 %v645, 0.0
        %v763 = vmax.f32 %v649, 0.0
        %v764 = vmax.f32 %v651, 0.0
        %v765 = vmax.f32 %v655, 0.0
        %v766 = vmax.f32 %v657, 0.0
        %v767 = vmax.f32 %v661, 0.0
        %v768 = vmax.f32 %v663, 0.0
        %v769 = vmax.f32 %v667, 0.0
        %v770 = vmax.f32 %v669, 0.0
        %v771 = vmax.f32 %v673, 0.0
        %v772 = vmax.f32 %v675, 0.0
        %v773 = vmax.f32 %v679, 0.0
        %v774 = vmax.f32 %v681, 0.0
        %v775 = vmax.f32 %v685, 0.0
        %v776 = vmax.f32 %v687, 0.0
        %v777 = vmax.f32 %v691, 0.0
        %v778 = vmax.f32 %v693, 0.0
        %v779 = vmax.f32 %v697, 0.0
        %v780 = vmax.f32 %v699, 0.0
        %v781 = vmax.f32 %v703, 0.0
        %v782 = vmax.f32 %v705, 0.0
        %v783 = vmax.f32 %v709, 0.0
        %v784 = vmax.f32 %v711, 0.0
        %v785 = vmax.f32 %v715, 0.0
        %v786 = vmax.f32 %v717, 0.0
        %v787 = vmax.f32 %v721, 0.0
        %v788 = vmax.f32 %v723, 0.0
        %v789 = vld [vmem:[%s2] sm:$0xff]
        %v790 = vld [vmem:[%s2 + $0x8] sm:$0xff]
        %v791 = vld [vmem:[%s2 + $0x10] sm:$0xff]
        %v792 = vld [vmem:[%s2 + $0x18] sm:$0xff]
        %v793 = vld [vmem:[%s2 + $0x20] sm:$0xff]
        %v794 = vld [vmem:[%s2 + $0x28] sm:$0xff]
        %v795 = vld [vmem:[%s2 + $0x30] sm:$0xff]
        %v796 = vld [vmem:[%s2 + $0x38] sm:$0xff]
        %v797 = vld [vmem:[%s2 + $0x40] sm:$0xff]
        %v798 = vld [vmem:[%s2 + $0x48] sm:$0xff]
        %v799 = vld [vmem:[%s2 + $0x50] sm:$0xff]
        %v800 = vld [vmem:[%s2 + $0x58] sm:$0xff]
        %v801 = vld [vmem:[%s2 + $0x60] sm:$0xff]
        %v802 = vld [vmem:[%s2 + $0x68] sm:$0xff]
        %v803 = vld [vmem:[%s2 + $0x70] sm:$0xff]
        %v804 = vld [vmem:[%s2 + $0x78] sm:$0xff]
        %v805 = vld [vmem:[%s2 + $0x80] sm:$0xff]
        %v806 = vld [vmem:[%s2 + $0x88] sm:$0xff]
        %v807 = vld [vmem:[%s2 + $0x90] sm:$0xff]
        %v808 = vld [vmem:[%s2 + $0x98] sm:$0xff]
        %v809 = vld [vmem:[%s2 + $0xa0] sm:$0xff]
        %v810 = vld [vmem:[%s2 + $0xa8] sm:$0xff]
        %v811 = vld [vmem:[%s2 + $0xb0] sm:$0xff]
        %v812 = vld [vmem:[%s2 + $0xb8] sm:$0xff]
        %v813 = vld [vmem:[%s2 + $0xc0] sm:$0xff]
        %v814 = vld [vmem:[%s2 + $0xc8] sm:$0xff]
        %v815 = vld [vmem:[%s2 + $0xd0] sm:$0xff]
        %v816 = vld [vmem:[%s2 + $0xd8] sm:$0xff]
        %v817 = vld [vmem:[%s2 + $0xe0] sm:$0xff]
        %v818 = vld [vmem:[%s2 + $0xe8] sm:$0xff]
        %v819 = vld [vmem:[%s2 + $0xf0] sm:$0xff]
        %v820 = vld [vmem:[%s2 + $0xf8] sm:$0xff]
        %v821 = vld [vmem:[%s2 + $0x100] sm:$0xff]
        %v822 = vld [vmem:[%s2 + $0x108] sm:$0xff]
        %v823 = vld [vmem:[%s2 + $0x110] sm:$0xff]
        %v824 = vld [vmem:[%s2 + $0x118] sm:$0xff]
        %v825 = vld [vmem:[%s2 + $0x120] sm:$0xff]
        %v826 = vld [vmem:[%s2 + $0x128] sm:$0xff]
        %v827 = vld [vmem:[%s2 + $0x130] sm:$0xff]
        %v828 = vld [vmem:[%s2 + $0x138] sm:$0xff]
        %v829 = vld [vmem:[%s2 + $0x140] sm:$0xff]
        %v830 = vld [vmem:[%s2 + $0x148] sm:$0xff]
        %v831 = vld [vmem:[%s2 + $0x150] sm:$0xff]
        %v832 = vld [vmem:[%s2 + $0x158] sm:$0xff]
        %v833 = vld [vmem:[%s2 + $0x160] sm:$0xff]
        %v834 = vld [vmem:[%s2 + $0x168] sm:$0xff]
        %v835 = vld [vmem:[%s2 + $0x170] sm:$0xff]
        %v836 = vld [vmem:[%s2 + $0x178] sm:$0xff]
        %v837 = vld [vmem:[%s2 + $0x180] sm:$0xff]
        %v838 = vld [vmem:[%s2 + $0x188] sm:$0xff]
        %v839 = vld [vmem:[%s2 + $0x190] sm:$0xff]
        %v840 = vld [vmem:[%s2 + $0x198] sm:$0xff]
        %v841 = vld [vmem:[%s2 + $0x1a0] sm:$0xff]
        %v842 = vld [vmem:[%s2 + $0x1a8] sm:$0xff]
        %v843 = vld [vmem:[%s2 + $0x1b0] sm:$0xff]
        %v844 = vld [vmem:[%s2 + $0x1b8] sm:$0xff]
        %v845 = vld [vmem:[%s2 + $0x1c0] sm:$0xff]
        %v846 = vld [vmem:[%s2 + $0x1c8] sm:$0xff]
        %v847 = vld [vmem:[%s2 + $0x1d0] sm:$0xff]
        %v848 = vld [vmem:[%s2 + $0x1d8] sm:$0xff]
        %v849 = vld [vmem:[%s2 + $0x1e0] sm:$0xff]
        %v850 = vld [vmem:[%s2 + $0x1e8] sm:$0xff]
        %v851 = vld [vmem:[%s2 + $0x1f0] sm:$0xff]
        %v852 = vld [vmem:[%s2 + $0x1f8] sm:$0xff]
        %v853 = vld [vmem:[%s3] sm:$0xff]
        %v854 = vld [vmem:[%s3 + $0x8] sm:$0xff]
        %v855 = vld [vmem:[%s3 + $0x10] sm:$0xff]
        %v856 = vld [vmem:[%s3 + $0x18] sm:$0xff]
        %v857 = vld [vmem:[%s3 + $0x20] sm:$0xff]
        %v858 = vld [vmem:[%s3 + $0x28] sm:$0xff]
        %v859 = vld [vmem:[%s3 + $0x30] sm:$0xff]
        %v860 = vld [vmem:[%s3 + $0x38] sm:$0xff]
        %v861 = vld [vmem:[%s3 + $0x40] sm:$0xff]
        %v862 = vld [vmem:[%s3 + $0x48] sm:$0xff]
        %v863 = vld [vmem:[%s3 + $0x50] sm:$0xff]
        %v864 = vld [vmem:[%s3 + $0x58] sm:$0xff]
        %v865 = vld [vmem:[%s3 + $0x60] sm:$0xff]
        %v866 = vld [vmem:[%s3 + $0x68] sm:$0xff]
        %v867 = vld [vmem:[%s3 + $0x70] sm:$0xff]
        %v868 = vld [vmem:[%s3 + $0x78] sm:$0xff]
        %v869 = vld [vmem:[%s3 + $0x80] sm:$0xff]
        %v870 = vld [vmem:[%s3 + $0x88] sm:$0xff]
        %v871 = vld [vmem:[%s3 + $0x90] sm:$0xff]
        %v872 = vld [vmem:[%s3 + $0x98] sm:$0xff]
        %v873 = vld [vmem:[%s3 + $0xa0] sm:$0xff]
        %v874 = vld [vmem:[%s3 + $0xa8] sm:$0xff]
        %v875 = vld [vmem:[%s3 + $0xb0] sm:$0xff]
        %v876 = vld [vmem:[%s3 + $0xb8] sm:$0xff]
        %v877 = vld [vmem:[%s3 + $0xc0] sm:$0xff]
        %v878 = vld [vmem:[%s3 + $0xc8] sm:$0xff]
        %v879 = vld [vmem:[%s3 + $0xd0] sm:$0xff]
        %v880 = vld [vmem:[%s3 + $0xd8] sm:$0xff]
        %v881 = vld [vmem:[%s3 + $0xe0] sm:$0xff]
        %v882 = vld [vmem:[%s3 + $0xe8] sm:$0xff]
        %v883 = vld [vmem:[%s3 + $0xf0] sm:$0xff]
        %v884 = vld [vmem:[%s3 + $0xf8] sm:$0xff]
        %886 = vset.pattern.permute.xlu0 0
        %887 = vperm.xlu0 %886, %v853
        %v888 = vpop.permute.xlu0 %887
        %891 = vset.pattern.permute.xlu0 0
        %892 = vperm.xlu0 %891, %v854
        %v893 = vpop.permute.xlu0 %892
        %896 = vset.pattern.permute.xlu0 0
        %897 = vperm.xlu0 %896, %v855
        %v898 = vpop.permute.xlu0 %897
        %901 = vset.pattern.permute.xlu0 0
        %902 = vperm.xlu0 %901, %v856
        %v903 = vpop.permute.xlu0 %902
        %906 = vset.pattern.permute.xlu0 0
        %907 = vperm.xlu0 %906, %v857
        %v908 = vpop.permute.xlu0 %907
        %911 = vset.pattern.permute.xlu0 0
        %912 = vperm.xlu0 %911, %v858
        %v913 = vpop.permute.xlu0 %912
        %916 = vset.pattern.permute.xlu0 0
        %917 = vperm.xlu0 %916, %v859
        %v918 = vpop.permute.xlu0 %917
        %921 = vset.pattern.permute.xlu0 0
        %922 = vperm.xlu0 %921, %v860
        %v923 = vpop.permute.xlu0 %922
        %926 = vset.pattern.permute.xlu0 0
        %927 = vperm.xlu0 %926, %v861
        %v928 = vpop.permute.xlu0 %927
        %931 = vset.pattern.permute.xlu0 0
        %932 = vperm.xlu0 %931, %v862
        %v933 = vpop.permute.xlu0 %932
        %936 = vset.pattern.permute.xlu0 0
        %937 = vperm.xlu0 %936, %v863
        %v938 = vpop.permute.xlu0 %937
        %941 = vset.pattern.permute.xlu0 0
        %942 = vperm.xlu0 %941, %v864
        %v943 = vpop.permute.xlu0 %942
        %946 = vset.pattern.permute.xlu0 0
        %947 = vperm.xlu0 %946, %v865
        %v948 = vpop.permute.xlu0 %947
        %951 = vset.pattern.permute.xlu0 0
        %952 = vperm.xlu0 %951, %v866
        %v953 = vpop.permute.xlu0 %952
        %956 = vset.pattern.permute.xlu0 0
        %957 = vperm.xlu0 %956, %v867
        %v958 = vpop.permute.xlu0 %957
        %961 = vset.pattern.permute.xlu0 0
        %962 = vperm.xlu0 %961, %v868
        %v963 = vpop.permute.xlu0 %962
        %966 = vset.pattern.permute.xlu0 0
        %967 = vperm.xlu0 %966, %v869
        %v968 = vpop.permute.xlu0 %967
        %971 = vset.pattern.permute.xlu0 0
        %972 = vperm.xlu0 %971, %v870
        %v973 = vpop.permute.xlu0 %972
        %976 = vset.pattern.permute.xlu0 0
        %977 = vperm.xlu0 %976, %v871
        %v978 = vpop.permute.xlu0 %977
        %981 = vset.pattern.permute.xlu0 0
        %982 = vperm.xlu0 %981, %v872
        %v983 = vpop.permute.xlu0 %982
        %986 = vset.pattern.permute.xlu0 0
        %987 = vperm.xlu0 %986, %v873
        %v988 = vpop.permute.xlu0 %987
        %991 = vset.pattern.permute.xlu0 0
        %992 = vperm.xlu0 %991, %v874
        %v993 = vpop.permute.xlu0 %992
        %996 = vset.pattern.permute.xlu0 0
        %997 = vperm.xlu0 %996, %v875
        %v998 = vpop.permute.xlu0 %997
        %1001 = vset.pattern.permute.xlu0 0
        %1002 = vperm.xlu0 %1001, %v876
        %v1003 = vpop.permute.xlu0 %1002
        %1006 = vset.pattern.permute.xlu0 0
        %1007 = vperm.xlu0 %1006, %v877
        %v1008 = vpop.permute.xlu0 %1007
        %1011 = vset.pattern.permute.xlu0 0
        %1012 = vperm.xlu0 %1011, %v878
        %v1013 = vpop.permute.xlu0 %1012
        %1016 = vset.pattern.permute.xlu0 0
        %1017 = vperm.xlu0 %1016, %v879
        %v1018 = vpop.permute.xlu0 %1017
        %1021 = vset.pattern.permute.xlu0 0
        %1022 = vperm.xlu0 %1021, %v880
        %v1023 = vpop.permute.xlu0 %1022
        %1026 = vset.pattern.permute.xlu0 0
        %1027 = vperm.xlu0 %1026, %v881
        %v1028 = vpop.permute.xlu0 %1027
        %1031 = vset.pattern.permute.xlu0 0
        %1032 = vperm.xlu0 %1031, %v882
        %v1033 = vpop.permute.xlu0 %1032
        %1036 = vset.pattern.permute.xlu0 0
        %1037 = vperm.xlu0 %1036, %v883
        %v1038 = vpop.permute.xlu0 %1037
        %1041 = vset.pattern.permute.xlu0 0
        %1042 = vperm.xlu0 %1041, %v884
        %v1043 = vpop.permute.xlu0 %1042
        %1045 = vmatprep.subr.mxu0 %v726
        %1046 = vmatpush1.msra.mxu0 %v725
        %1047 = vmatprep.subr.mxu0 %v728
        %1048 = vmatpush1.msra.mxu0 %v727
        %1049 = vmatprep.subr.mxu0 %v730
        %1050 = vmatpush1.msra.mxu0 %v729
        %1051 = vmatprep.subr.mxu0 %v732
        %1052 = vmatpush1.msra.mxu0 %v731
        %1053 = vmatprep.subr.mxu0 %v734
        %1054 = vmatpush1.msra.mxu0 %v733
        %1055 = vmatprep.subr.mxu0 %v736
        %1056 = vmatpush1.msra.mxu0 %v735
        %1057 = vmatprep.subr.mxu0 %v738
        %1058 = vmatpush1.msra.mxu0 %v737
        %1059 = vmatprep.subr.mxu0 %v740
        %1060 = vmatpush1.msra.mxu0 %v739
        %1061 = vmatprep.subr.mxu0 %v742
        %1062 = vmatpush1.msra.mxu0 %v741
        %1063 = vmatprep.subr.mxu0 %v744
        %1064 = vmatpush1.msra.mxu0 %v743
        %1065 = vmatprep.subr.mxu0 %v746
        %1066 = vmatpush1.msra.mxu0 %v745
        %1067 = vmatprep.subr.mxu0 %v748
        %1068 = vmatpush1.msra.mxu0 %v747
        %1069 = vmatprep.subr.mxu0 %v750
        %1070 = vmatpush1.msra.mxu0 %v749
        %1071 = vmatprep.subr.mxu0 %v752
        %1072 = vmatpush1.msra.mxu0 %v751
        %1073 = vmatprep.subr.mxu0 %v754
        %1074 = vmatpush1.msra.mxu0 %v753
        %1075 = vmatprep.subr.mxu0 %v756
        %1076 = vmatpush1.msra.mxu0 %v755
        %1077 = vmatprep.subr.mxu0 %v758
        %1078 = vmatpush1.msra.mxu0 %v757
        %1079 = vmatprep.subr.mxu0 %v760
        %1080 = vmatpush1.msra.mxu0 %v759
        %1081 = vmatprep.subr.mxu0 %v762
        %1082 = vmatpush1.msra.mxu0 %v761
        %1083 = vmatprep.subr.mxu0 %v764
        %1084 = vmatpush1.msra.mxu0 %v763
        %1085 = vmatprep.subr.mxu0 %v766
        %1086 = vmatpush1.msra.mxu0 %v765
        %1087 = vmatprep.subr.mxu0 %v768
        %1088 = vmatpush1.msra.mxu0 %v767
        %1089 = vmatprep.subr.mxu0 %v770
        %1090 = vmatpush1.msra.mxu0 %v769
        %1091 = vmatprep.subr.mxu0 %v772
        %1092 = vmatpush1.msra.mxu0 %v771
        %1093 = vmatprep.subr.mxu0 %v774
        %1094 = vmatpush1.msra.mxu0 %v773
        %1095 = vmatprep.subr.mxu0 %v776
        %1096 = vmatpush1.msra.mxu0 %v775
        %1097 = vmatprep.subr.mxu0 %v778
        %1098 = vmatpush1.msra.mxu0 %v777
        %1099 = vmatprep.subr.mxu0 %v780
        %1100 = vmatpush1.msra.mxu0 %v779
        %1101 = vmatprep.subr.mxu0 %v782
        %1102 = vmatpush1.msra.mxu0 %v781
        %1103 = vmatprep.subr.mxu0 %v784
        %1104 = vmatpush1.msra.mxu0 %v783
        %1105 = vmatprep.subr.mxu0 %v786
        %1106 = vmatpush1.msra.mxu0 %v785
        %1107 = vmatprep.subr.mxu0 %v788
        %1108 = vmatpush1.msra.mxu0 %v787
        %1109 = vmatprep.mubr.f32.mxu0 %v790
        %1110 = vmatmul.mubr.f32.gmra.mrb[0].mxu0 %v789
        %v1111 = vpop.f32.mrb[0].mxu0
        %v1112 = vadd.f32 %v888, %v1111
        %v1113 = vpop.f32.mrb[0].mxu0
        %v1114 = vadd.f32 %v888, %v1113
        %1115 = vmatprep.mubr.f32.mxu0 %v792
        %1116 = vmatmul.mubr.f32.gmra.mrb[0].mxu0 %v791
        %v1117 = vpop.f32.mrb[0].mxu0
        %v1118 = vadd.f32 %v893, %v1117
        %v1119 = vpop.f32.mrb[0].mxu0
        %v1120 = vadd.f32 %v893, %v1119
        %1121 = vmatprep.mubr.f32.mxu0 %v794
        %1122 = vmatmul.mubr.f32.gmra.mrb[0].mxu0 %v793
        %v1123 = vpop.f32.mrb[0].mxu0
        %v1124 = vadd.f32 %v898, %v1123
        %v1125 = vpop.f32.mrb[0].mxu0
        %v1126 = vadd.f32 %v898, %v1125
        %1127 = vmatprep.mubr.f32.mxu0 %v796
        %1128 = vmatmul.mubr.f32.gmra.mrb[0].mxu0 %v795
        %v1129 = vpop.f32.mrb[0].mxu0
        %v1130 = vadd.f32 %v903, %v1129
        %v1131 = vpop.f32.mrb[0].mxu0
        %v1132 = vadd.f32 %v903, %v1131
        %1133 = vmatprep.mubr.f32.mxu0 %v798
        %1134 = vmatmul.mubr.f32.gmra.mrb[0].mxu0 %v797
        %v1135 = vpop.f32.mrb[0].mxu0
        %v1136 = vadd.f32 %v908, %v1135
        %v1137 = vpop.f32.mrb[0].mxu0
        %v1138 = vadd.f32 %v908, %v1137
        %1139 = vmatprep.mubr.f32.mxu0 %v800
        %1140 = vmatmul.mubr.f32.gmra.mrb[0].mxu0 %v799
        %v1141 = vpop.f32.mrb[0].mxu0
        %v1142 = vadd.f32 %v913, %v1141
        %v1143 = vpop.f32.mrb[0].mxu0
        %v1144 = vadd.f32 %v913, %v1143
        %1145 = vmatprep.mubr.f32.mxu0 %v802
        %1146 = vmatmul.mubr.f32.gmra.mrb[0].mxu0 %v801
        %v1147 = vpop.f32.mrb[0].mxu0
        %v1148 = vadd.f32 %v918, %v1147
        %v1149 = vpop.f32.mrb[0].mxu0
        %v1150 = vadd.f32 %v918, %v1149
        %1151 = vmatprep.mubr.f32.mxu0 %v804
        %1152 = vmatmul.mubr.f32.gmra.mrb[0].mxu0 %v803
        %v1153 = vpop.f32.mrb[0].mxu0
        %v1154 = vadd.f32 %v923, %v1153
        %v1155 = vpop.f32.mrb[0].mxu0
        %v1156 = vadd.f32 %v923, %v1155
        %1157 = vmatprep.mubr.f32.mxu0 %v806
        %1158 = vmatmul.mubr.f32.gmra.mrb[0].mxu0 %v805
        %v1159 = vpop.f32.mrb[0].mxu0
        %v1160 = vadd.f32 %v928, %v1159
        %v1161 = vpop.f32.mrb[0].mxu0
        %v1162 = vadd.f32 %v928, %v1161
        %1163 = vmatprep.mubr.f32.mxu0 %v808
        %1164 = vmatmul.mubr.f32.gmra.mrb[0].mxu0 %v807
        %v1165 = vpop.f32.mrb[0].mxu0
        %v1166 = vadd.f32 %v933, %v1165
        %v1167 = vpop.f32.mrb[0].mxu0
        %v1168 = vadd.f32 %v933, %v1167
        %1169 = vmatprep.mubr.f32.mxu0 %v810
        %1170 = vmatmul.mubr.f32.gmra.mrb[0].mxu0 %v809
        %v1171 = vpop.f32.mrb[0].mxu0
        %v1172 = vadd.f32 %v938, %v1171
        %v1173 = vpop.f32.mrb[0].mxu0
        %v1174 = vadd.f32 %v938, %v1173
        %1175 = vmatprep.mubr.f32.mxu0 %v812
        %1176 = vmatmul.mubr.f32.gmra.mrb[0].mxu0 %v811
        %v1177 = vpop.f32.mrb[0].mxu0
        %v1178 = vadd.f32 %v943, %v1177
        %v1179 = vpop.f32.mrb[0].mxu0
        %v1180 = vadd.f32 %v943, %v1179
        %1181 = vmatprep.mubr.f32.mxu0 %v814
        %1182 = vmatmul.mubr.f32.gmra.mrb[0].mxu0 %v813
        %v1183 = vpop.f32.mrb[0].mxu0
        %v1184 = vadd.f32 %v948, %v1183
        %v1185 = vpop.f32.mrb[0].mxu0
        %v1186 = vadd.f32 %v948, %v1185
        %1187 = vmatprep.mubr.f32.mxu0 %v816
        %1188 = vmatmul.mubr.f32.gmra.mrb[0].mxu0 %v815
        %v1189 = vpop.f32.mrb[0].mxu0
        %v1190 = vadd.f32 %v953, %v1189
        %v1191 = vpop.f32.mrb[0].mxu0
        %v1192 = vadd.f32 %v953, %v1191
        %1193 = vmatprep.mubr.f32.mxu0 %v818
        %1194 = vmatmul.mubr.f32.gmra.mrb[0].mxu0 %v817
        %v1195 = vpop.f32.mrb[0].mxu0
        %v1196 = vadd.f32 %v958, %v1195
        %v1197 = vpop.f32.mrb[0].mxu0
        %v1198 = vadd.f32 %v958, %v1197
        %1199 = vmatprep.mubr.f32.mxu0 %v820
        %1200 = vmatmul.mubr.f32.gmra.mrb[0].mxu0 %v819
        %v1201 = vpop.f32.mrb[0].mxu0
        %v1202 = vadd.f32 %v963, %v1201
        %v1203 = vpop.f32.mrb[0].mxu0
        %v1204 = vadd.f32 %v963, %v1203
        %1205 = vmatprep.mubr.f32.mxu0 %v822
        %1206 = vmatmul.mubr.f32.gmra.mrb[0].mxu0 %v821
        %v1207 = vpop.f32.mrb[0].mxu0
        %v1208 = vadd.f32 %v968, %v1207
        %v1209 = vpop.f32.mrb[0].mxu0
        %v1210 = vadd.f32 %v968, %v1209
        %1211 = vmatprep.mubr.f32.mxu0 %v824
        %1212 = vmatmul.mubr.f32.gmra.mrb[0].mxu0 %v823
        %v1213 = vpop.f32.mrb[0].mxu0
        %v1214 = vadd.f32 %v973, %v1213
        %v1215 = vpop.f32.mrb[0].mxu0
        %v1216 = vadd.f32 %v973, %v1215
        %1217 = vmatprep.mubr.f32.mxu0 %v826
        %1218 = vmatmul.mubr.f32.gmra.mrb[0].mxu0 %v825
        %v1219 = vpop.f32.mrb[0].mxu0
        %v1220 = vadd.f32 %v978, %v1219
        %v1221 = vpop.f32.mrb[0].mxu0
        %v1222 = vadd.f32 %v978, %v1221
        %1223 = vmatprep.mubr.f32.mxu0 %v828
        %1224 = vmatmul.mubr.f32.gmra.mrb[0].mxu0 %v827
        %v1225 = vpop.f32.mrb[0].mxu0
        %v1226 = vadd.f32 %v983, %v1225
        %v1227 = vpop.f32.mrb[0].mxu0
        %v1228 = vadd.f32 %v983, %v1227
        %1229 = vmatprep.mubr.f32.mxu0 %v830
        %1230 = vmatmul.mubr.f32.gmra.mrb[0].mxu0 %v829
        %v1231 = vpop.f32.mrb[0].mxu0
        %v1232 = vadd.f32 %v988, %v1231
        %v1233 = vpop.f32.mrb[0].mxu0
        %v1234 = vadd.f32 %v988, %v1233
        %1235 = vmatprep.mubr.f32.mxu0 %v832
        %1236 = vmatmul.mubr.f32.gmra.mrb[0].mxu0 %v831
        %v1237 = vpop.f32.mrb[0].mxu0
        %v1238 = vadd.f32 %v993, %v1237
        %v1239 = vpop.f32.mrb[0].mxu0
        %v1240 = vadd.f32 %v993, %v1239
        %1241 = vmatprep.mubr.f32.mxu0 %v834
        %1242 = vmatmul.mubr.f32.gmra.mrb[0].mxu0 %v833
        %v1243 = vpop.f32.mrb[0].mxu0
        %v1244 = vadd.f32 %v998, %v1243
        %v1245 = vpop.f32.mrb[0].mxu0
        %v1246 = vadd.f32 %v998, %v1245
        %1247 = vmatprep.mubr.f32.mxu0 %v836
        %1248 = vmatmul.mubr.f32.gmra.mrb[0].mxu0 %v835
        %v1249 = vpop.f32.mrb[0].mxu0
        %v1250 = vadd.f32 %v1003, %v1249
        %v1251 = vpop.f32.mrb[0].mxu0
        %v1252 = vadd.f32 %v1003, %v1251
        %1253 = vmatprep.mubr.f32.mxu0 %v838
        %1254 = vmatmul.mubr.f32.gmra.mrb[0].mxu0 %v837
        %v1255 = vpop.f32.mrb[0].mxu0
        %v1256 = vadd.f32 %v1008, %v1255
        %v1257 = vpop.f32.mrb[0].mxu0
        %v1258 = vadd.f32 %v1008, %v1257
        %1259 = vmatprep.mubr.f32.mxu0 %v840
        %1260 = vmatmul.mubr.f32.gmra.mrb[0].mxu0 %v839
        %v1261 = vpop.f32.mrb[0].mxu0
        %v1262 = vadd.f32 %v1013, %v1261
        %v1263 = vpop.f32.mrb[0].mxu0
        %v1264 = vadd.f32 %v1013, %v1263
        %1265 = vmatprep.mubr.f32.mxu0 %v842
        %1266 = vmatmul.mubr.f32.gmra.mrb[0].mxu0 %v841
        %v1267 = vpop.f32.mrb[0].mxu0
        %v1268 = vadd.f32 %v1018, %v1267
        %v1269 = vpop.f32.mrb[0].mxu0
        %v1270 = vadd.f32 %v1018, %v1269
        %1271 = vmatprep.mubr.f32.mxu0 %v844
        %1272 = vmatmul.mubr.f32.gmra.mrb[0].mxu0 %v843
        %v1273 = vpop.f32.mrb[0].mxu0
        %v1274 = vadd.f32 %v1023, %v1273
        %v1275 = vpop.f32.mrb[0].mxu0
        %v1276 = vadd.f32 %v1023, %v1275
        %1277 = vmatprep.mubr.f32.mxu0 %v846
        %1278 = vmatmul.mubr.f32.gmra.mrb[0].mxu0 %v845
        %v1279 = vpop.f32.mrb[0].mxu0
        %v1280 = vadd.f32 %v1028, %v1279
        %v1281 = vpop.f32.mrb[0].mxu0
        %v1282 = vadd.f32 %v1028, %v1281
        %1283 = vmatprep.mubr.f32.mxu0 %v848
        %1284 = vmatmul.mubr.f32.gmra.mrb[0].mxu0 %v847
        %v1285 = vpop.f32.mrb[0].mxu0
        %v1286 = vadd.f32 %v1033, %v1285
        %v1287 = vpop.f32.mrb[0].mxu0
        %v1288 = vadd.f32 %v1033, %v1287
        %1289 = vmatprep.mubr.f32.mxu0 %v850
        %1290 = vmatmul.mubr.f32.gmra.mrb[0].mxu0 %v849
        %v1291 = vpop.f32.mrb[0].mxu0
        %v1292 = vadd.f32 %v1038, %v1291
        %v1293 = vpop.f32.mrb[0].mxu0
        %v1294 = vadd.f32 %v1038, %v1293
        %1295 = vmatprep.mubr.f32.mxu0 %v852
        %1296 = vmatmul.mubr.f32.gmra.mrb[0].mxu0 %v851
        %v1297 = vpop.f32.mrb[0].mxu0
        %v1298 = vadd.f32 %v1043, %v1297
        %v1299 = vpop.f32.mrb[0].mxu0
        %v1300 = vadd.f32 %v1043, %v1299
        %1301 = vdwg.mxu0
        %v1302 = vmax.f32 %v1112, 0.0
        %v1303 = vmax.f32 %v1114, 0.0
        %v1304 = vmax.f32 %v1118, 0.0
        %v1305 = vmax.f32 %v1120, 0.0
        %v1306 = vmax.f32 %v1124, 0.0
        %v1307 = vmax.f32 %v1126, 0.0
        %v1308 = vmax.f32 %v1130, 0.0
        %v1309 = vmax.f32 %v1132, 0.0
        %v1310 = vmax.f32 %v1136, 0.0
        %v1311 = vmax.f32 %v1138, 0.0
        %v1312 = vmax.f32 %v1142, 0.0
        %v1313 = vmax.f32 %v1144, 0.0
        %v1314 = vmax.f32 %v1148, 0.0
        %v1315 = vmax.f32 %v1150, 0.0
        %v1316 = vmax.f32 %v1154, 0.0
        %v1317 = vmax.f32 %v1156, 0.0
        %v1318 = vmax.f32 %v1160, 0.0
        %v1319 = vmax.f32 %v1162, 0.0
        %v1320 = vmax.f32 %v1166, 0.0
        %v1321 = vmax.f32 %v1168, 0.0
        %v1322 = vmax.f32 %v1172, 0.0
        %v1323 = vmax.f32 %v1174, 0.0
        %v1324 = vmax.f32 %v1178, 0.0
        %v1325 = vmax.f32 %v1180, 0.0
        %v1326 = vmax.f32 %v1184, 0.0
        %v1327 = vmax.f32 %v1186, 0.0
        %v1328 = vmax.f32 %v1190, 0.0
        %v1329 = vmax.f32 %v1192, 0.0
        %v1330 = vmax.f32 %v1196, 0.0
        %v1331 = vmax.f32 %v1198, 0.0
        %v1332 = vmax.f32 %v1202, 0.0
        %v1333 = vmax.f32 %v1204, 0.0
        %v1334 = vmax.f32 %v1208, 0.0
        %v1335 = vmax.f32 %v1210, 0.0
        %v1336 = vmax.f32 %v1214, 0.0
        %v1337 = vmax.f32 %v1216, 0.0
        %v1338 = vmax.f32 %v1220, 0.0
        %v1339 = vmax.f32 %v1222, 0.0
        %v1340 = vmax.f32 %v1226, 0.0
        %v1341 = vmax.f32 %v1228, 0.0
        %v1342 = vmax.f32 %v1232, 0.0
        %v1343 = vmax.f32 %v1234, 0.0
        %v1344 = vmax.f32 %v1238, 0.0
        %v1345 = vmax.f32 %v1240, 0.0
        %v1346 = vmax.f32 %v1244, 0.0
        %v1347 = vmax.f32 %v1246, 0.0
        %v1348 = vmax.f32 %v1250, 0.0
        %v1349 = vmax.f32 %v1252, 0.0
        %v1350 = vmax.f32 %v1256, 0.0
        %v1351 = vmax.f32 %v1258, 0.0
        %v1352 = vmax.f32 %v1262, 0.0
        %v1353 = vmax.f32 %v1264, 0.0
        %v1354 = vmax.f32 %v1268, 0.0
        %v1355 = vmax.f32 %v1270, 0.0
        %v1356 = vmax.f32 %v1274, 0.0
        %v1357 = vmax.f32 %v1276, 0.0
        %v1358 = vmax.f32 %v1280, 0.0
        %v1359 = vmax.f32 %v1282, 0.0
        %v1360 = vmax.f32 %v1286, 0.0
        %v1361 = vmax.f32 %v1288, 0.0
        %v1362 = vmax.f32 %v1292, 0.0
        %v1363 = vmax.f32 %v1294, 0.0
        %v1364 = vmax.f32 %v1298, 0.0
        %v1365 = vmax.f32 %v1300, 0.0
        %v1366 = vld [vmem:[%s4] sm:$0xff]
        %v1367 = vld [vmem:[%s4 + $0x8] sm:$0xff]
        %v1368 = vld [vmem:[%s4 + $0x10] sm:$0xff]
        %v1369 = vld [vmem:[%s4 + $0x18] sm:$0xff]
        %v1370 = vld [vmem:[%s4 + $0x20] sm:$0xff]
        %v1371 = vld [vmem:[%s4 + $0x28] sm:$0xff]
        %v1372 = vld [vmem:[%s4 + $0x30] sm:$0xff]
        %v1373 = vld [vmem:[%s4 + $0x38] sm:$0xff]
        %v1374 = vld [vmem:[%s4 + $0x40] sm:$0xff]
        %v1375 = vld [vmem:[%s4 + $0x48] sm:$0xff]
        %v1376 = vld [vmem:[%s4 + $0x50] sm:$0xff]
        %v1377 = vld [vmem:[%s4 + $0x58] sm:$0xff]
        %v1378 = vld [vmem:[%s4 + $0x60] sm:$0xff]
        %v1379 = vld [vmem:[%s4 + $0x68] sm:$0xff]
        %v1380 = vld [vmem:[%s4 + $0x70] sm:$0xff]
        %v1381 = vld [vmem:[%s4 + $0x78] sm:$0xff]
        %v1382 = vld [vmem:[%s4 + $0x80] sm:$0xff]
        %v1383 = vld [vmem:[%s4 + $0x88] sm:$0xff]
        %v1384 = vld [vmem:[%s4 + $0x90] sm:$0xff]
        %v1385 = vld [vmem:[%s4 + $0x98] sm:$0xff]
        %v1386 = vld [vmem:[%s4 + $0xa0] sm:$0xff]
        %v1387 = vld [vmem:[%s4 + $0xa8] sm:$0xff]
        %v1388 = vld [vmem:[%s4 + $0xb0] sm:$0xff]
        %v1389 = vld [vmem:[%s4 + $0xb8] sm:$0xff]
        %v1390 = vld [vmem:[%s4 + $0xc0] sm:$0xff]
        %v1391 = vld [vmem:[%s4 + $0xc8] sm:$0xff]
        %v1392 = vld [vmem:[%s4 + $0xd0] sm:$0xff]
        %v1393 = vld [vmem:[%s4 + $0xd8] sm:$0xff]
        %v1394 = vld [vmem:[%s4 + $0xe0] sm:$0xff]
        %v1395 = vld [vmem:[%s4 + $0xe8] sm:$0xff]
        %v1396 = vld [vmem:[%s4 + $0xf0] sm:$0xff]
        %v1397 = vld [vmem:[%s4 + $0xf8] sm:$0xff]
        %v1398 = vld [vmem:[%s4 + $0x100] sm:$0xff]
        %v1399 = vld [vmem:[%s4 + $0x108] sm:$0xff]
        %v1400 = vld [vmem:[%s4 + $0x110] sm:$0xff]
        %v1401 = vld [vmem:[%s4 + $0x118] sm:$0xff]
        %v1402 = vld [vmem:[%s4 + $0x120] sm:$0xff]
        %v1403 = vld [vmem:[%s4 + $0x128] sm:$0xff]
        %v1404 = vld [vmem:[%s4 + $0x130] sm:$0xff]
        %v1405 = vld [vmem:[%s4 + $0x138] sm:$0xff]
        %v1406 = vld [vmem:[%s4 + $0x140] sm:$0xff]
        %v1407 = vld [vmem:[%s4 + $0x148] sm:$0xff]
        %v1408 = vld [vmem:[%s4 + $0x150] sm:$0xff]
        %v1409 = vld [vmem:[%s4 + $0x158] sm:$0xff]
        %v1410 = vld [vmem:[%s4 + $0x160] sm:$0xff]
        %v1411 = vld [vmem:[%s4 + $0x168] sm:$0xff]
        %v1412 = vld [vmem:[%s4 + $0x170] sm:$0xff]
        %v1413 = vld [vmem:[%s4 + $0x178] sm:$0xff]
        %v1414 = vld [vmem:[%s4 + $0x180] sm:$0xff]
        %v1415 = vld [vmem:[%s4 + $0x188] sm:$0xff]
        %v1416 = vld [vmem:[%s4 + $0x190] sm:$0xff]
        %v1417 = vld [vmem:[%s4 + $0x198] sm:$0xff]
        %v1418 = vld [vmem:[%s4 + $0x1a0] sm:$0xff]
        %v1419 = vld [vmem:[%s4 + $0x1a8] sm:$0xff]
        %v1420 = vld [vmem:[%s4 + $0x1b0] sm:$0xff]
        %v1421 = vld [vmem:[%s4 + $0x1b8] sm:$0xff]
        %v1422 = vld [vmem:[%s4 + $0x1c0] sm:$0xff]
        %v1423 = vld [vmem:[%s4 + $0x1c8] sm:$0xff]
        %v1424 = vld [vmem:[%s4 + $0x1d0] sm:$0xff]
        %v1425 = vld [vmem:[%s4 + $0x1d8] sm:$0xff]
        %v1426 = vld [vmem:[%s4 + $0x1e0] sm:$0xff]
        %v1427 = vld [vmem:[%s4 + $0x1e8] sm:$0xff]
        %v1428 = vld [vmem:[%s4 + $0x1f0] sm:$0xff]
        %v1429 = vld [vmem:[%s4 + $0x1f8] sm:$0xff]
        %v1430 = vld [vmem:[%s5] sm:$0xff]
        %v1431 = vld [vmem:[%s5 + $0x8] sm:$0xff]
        %v1432 = vld [vmem:[%s5 + $0x10] sm:$0xff]
        %v1433 = vld [vmem:[%s5 + $0x18] sm:$0xff]
        %v1434 = vld [vmem:[%s5 + $0x20] sm:$0xff]
        %v1435 = vld [vmem:[%s5 + $0x28] sm:$0xff]
        %v1436 = vld [vmem:[%s5 + $0x30] sm:$0xff]
        %v1437 = vld [vmem:[%s5 + $0x38] sm:$0xff]
        %v1438 = vld [vmem:[%s5 + $0x40] sm:$0xff]
        %v1439 = vld [vmem:[%s5 + $0x48] sm:$0xff]
        %v1440 = vld [vmem:[%s5 + $0x50] sm:$0xff]
        %v1441 = vld [vmem:[%s5 + $0x58] sm:$0xff]
        %v1442 = vld [vmem:[%s5 + $0x60] sm:$0xff]
        %v1443 = vld [vmem:[%s5 + $0x68] sm:$0xff]
        %v1444 = vld [vmem:[%s5 + $0x70] sm:$0xff]
        %v1445 = vld [vmem:[%s5 + $0x78] sm:$0xff]
        %v1446 = vld [vmem:[%s5 + $0x80] sm:$0xff]
        %v1447 = vld [vmem:[%s5 + $0x88] sm:$0xff]
        %v1448 = vld [vmem:[%s5 + $0x90] sm:$0xff]
        %v1449 = vld [vmem:[%s5 + $0x98] sm:$0xff]
        %v1450 = vld [vmem:[%s5 + $0xa0] sm:$0xff]
        %v1451 = vld [vmem:[%s5 + $0xa8] sm:$0xff]
        %v1452 = vld [vmem:[%s5 + $0xb0] sm:$0xff]
        %v1453 = vld [vmem:[%s5 + $0xb8] sm:$0xff]
        %v1454 = vld [vmem:[%s5 + $0xc0] sm:$0xff]
        %v1455 = vld [vmem:[%s5 + $0xc8] sm:$0xff]
        %v1456 = vld [vmem:[%s5 + $0xd0] sm:$0xff]
        %v1457 = vld [vmem:[%s5 + $0xd8] sm:$0xff]
        %v1458 = vld [vmem:[%s5 + $0xe0] sm:$0xff]
        %v1459 = vld [vmem:[%s5 + $0xe8] sm:$0xff]
        %v1460 = vld [vmem:[%s5 + $0xf0] sm:$0xff]
        %v1461 = vld [vmem:[%s5 + $0xf8] sm:$0xff]
        %1463 = vset.pattern.permute.xlu0 0
        %1464 = vperm.xlu0 %1463, %v1430
        %v1465 = vpop.permute.xlu0 %1464
        %1468 = vset.pattern.permute.xlu0 0
        %1469 = vperm.xlu0 %1468, %v1431
        %v1470 = vpop.permute.xlu0 %1469
        %1473 = vset.pattern.permute.xlu0 0
        %1474 = vperm.xlu0 %1473, %v1432
        %v1475 = vpop.permute.xlu0 %1474
        %1478 = vset.pattern.permute.xlu0 0
        %1479 = vperm.xlu0 %1478, %v1433
        %v1480 = vpop.permute.xlu0 %1479
        %1483 = vset.pattern.permute.xlu0 0
        %1484 = vperm.xlu0 %1483, %v1434
        %v1485 = vpop.permute.xlu0 %1484
        %1488 = vset.pattern.permute.xlu0 0
        %1489 = vperm.xlu0 %1488, %v1435
        %v1490 = vpop.permute.xlu0 %1489
        %1493 = vset.pattern.permute.xlu0 0
        %1494 = vperm.xlu0 %1493, %v1436
        %v1495 = vpop.permute.xlu0 %1494
        %1498 = vset.pattern.permute.xlu0 0
        %1499 = vperm.xlu0 %1498, %v1437
        %v1500 = vpop.permute.xlu0 %1499
        %1503 = vset.pattern.permute.xlu0 0
        %1504 = vperm.xlu0 %1503, %v1438
        %v1505 = vpop.permute.xlu0 %1504
        %1508 = vset.pattern.permute.xlu0 0
        %1509 = vperm.xlu0 %1508, %v1439
        %v1510 = vpop.permute.xlu0 %1509
        %1513 = vset.pattern.permute.xlu0 0
        %1514 = vperm.xlu0 %1513, %v1440
        %v1515 = vpop.permute.xlu0 %1514
        %1518 = vset.pattern.permute.xlu0 0
        %1519 = vperm.xlu0 %1518, %v1441
        %v1520 = vpop.permute.xlu0 %1519
        %1523 = vset.pattern.permute.xlu0 0
        %1524 = vperm.xlu0 %1523, %v1442
        %v1525 = vpop.permute.xlu0 %1524
        %1528 = vset.pattern.permute.xlu0 0
        %1529 = vperm.xlu0 %1528, %v1443
        %v1530 = vpop.permute.xlu0 %1529
        %1533 = vset.pattern.permute.xlu0 0
        %1534 = vperm.xlu0 %1533, %v1444
        %v1535 = vpop.permute.xlu0 %1534
        %1538 = vset.pattern.permute.xlu0 0
        %1539 = vperm.xlu0 %1538, %v1445
        %v1540 = vpop.permute.xlu0 %1539
        %1543 = vset.pattern.permute.xlu0 0
        %1544 = vperm.xlu0 %1543, %v1446
        %v1545 = vpop.permute.xlu0 %1544
        %1548 = vset.pattern.permute.xlu0 0
        %1549 = vperm.xlu0 %1548, %v1447
        %v1550 = vpop.permute.xlu0 %1549
        %1553 = vset.pattern.permute.xlu0 0
        %1554 = vperm.xlu0 %1553, %v1448
        %v1555 = vpop.permute.xlu0 %1554
        %1558 = vset.pattern.permute.xlu0 0
        %1559 = vperm.xlu0 %1558, %v1449
        %v1560 = vpop.permute.xlu0 %1559
        %1563 = vset.pattern.permute.xlu0 0
        %1564 = vperm.xlu0 %1563, %v1450
        %v1565 = vpop.permute.xlu0 %1564
        %1568 = vset.pattern.permute.xlu0 0
        %1569 = vperm.xlu0 %1568, %v1451
        %v1570 = vpop.permute.xlu0 %1569
        %1573 = vset.pattern.permute.xlu0 0
        %1574 = vperm.xlu0 %1573, %v1452
        %v1575 = vpop.permute.xlu0 %1574
        %1578 = vset.pattern.permute.xlu0 0
        %1579 = vperm.xlu0 %1578, %v1453
        %v1580 = vpop.permute.xlu0 %1579
        %1583 = vset.pattern.permute.xlu0 0
        %1584 = vperm.xlu0 %1583, %v1454
        %v1585 = vpop.permute.xlu0 %1584
        %1588 = vset.pattern.permute.xlu0 0
        %1589 = vperm.xlu0 %1588, %v1455
        %v1590 = vpop.permute.xlu0 %1589
        %1593 = vset.pattern.permute.xlu0 0
        %1594 = vperm.xlu0 %1593, %v1456
        %v1595 = vpop.permute.xlu0 %1594
        %1598 = vset.pattern.permute.xlu0 0
        %1599 = vperm.xlu0 %1598, %v1457
        %v1600 = vpop.permute.xlu0 %1599
        %1603 = vset.pattern.permute.xlu0 0
        %1604 = vperm.xlu0 %1603, %v1458
        %v1605 = vpop.permute.xlu0 %1604
        %1608 = vset.pattern.permute.xlu0 0
        %1609 = vperm.xlu0 %1608, %v1459
        %v1610 = vpop.permute.xlu0 %1609
        %1613 = vset.pattern.permute.xlu0 0
        %1614 = vperm.xlu0 %1613, %v1460
        %v1615 = vpop.permute.xlu0 %1614
        %1618 = vset.pattern.permute.xlu0 0
        %1619 = vperm.xlu0 %1618, %v1461
        %v1620 = vpop.permute.xlu0 %1619
        %1622 = vmatprep.subr.mxu0 %v1303
        %1623 = vmatpush1.msra.mxu0 %v1302
        %1624 = vmatprep.subr.mxu0 %v1305
        %1625 = vmatpush1.msra.mxu0 %v1304
        %1626 = vmatprep.subr.mxu0 %v1307
        %1627 = vmatpush1.msra.mxu0 %v1306
        %1628 = vmatprep.subr.mxu0 %v1309
        %1629 = vmatpush1.msra.mxu0 %v1308
        %1630 = vmatprep.subr.mxu0 %v1311
        %1631 = vmatpush1.msra.mxu0 %v1310
        %1632 = vmatprep.subr.mxu0 %v1313
        %1633 = vmatpush1.msra.mxu0 %v1312
        %1634 = vmatprep.subr.mxu0 %v1315
        %1635 = vmatpush1.msra.mxu0 %v1314
        %1636 = vmatprep.subr.mxu0 %v1317
        %1637 = vmatpush1.msra.mxu0 %v1316
        %1638 = vmatprep.subr.mxu0 %v1319
        %1639 = vmatpush1.msra.mxu0 %v1318
        %1640 = vmatprep.subr.mxu0 %v1321
        %1641 = vmatpush1.msra.mxu0 %v1320
        %1642 = vmatprep.subr.mxu0 %v1323
        %1643 = vmatpush1.msra.mxu0 %v1322
        %1644 = vmatprep.subr.mxu0 %v1325
        %1645 = vmatpush1.msra.mxu0 %v1324
        %1646 = vmatprep.subr.mxu0 %v1327
        %1647 = vmatpush1.msra.mxu0 %v1326
        %1648 = vmatprep.subr.mxu0 %v1329
        %1649 = vmatpush1.msra.mxu0 %v1328
        %1650 = vmatprep.subr.mxu0 %v1331
        %1651 = vmatpush1.msra.mxu0 %v1330
        %1652 = vmatprep.subr.mxu0 %v1333
        %1653 = vmatpush1.msra.mxu0 %v1332
        %1654 = vmatprep.subr.mxu0 %v1335
        %1655 = vmatpush1.msra.mxu0 %v1334
        %1656 = vmatprep.subr.mxu0 %v1337
        %1657 = vmatpush1.msra.mxu0 %v1336
        %1658 = vmatprep.subr.mxu0 %v1339
        %1659 = vmatpush1.msra.mxu0 %v1338
        %1660 = vmatprep.subr.mxu0 %v1341
        %1661 = vmatpush1.msra.mxu0 %v1340
        %1662 = vmatprep.subr.mxu0 %v1343
        %1663 = vmatpush1.msra.mxu0 %v1342
        %1664 = vmatprep.subr.mxu0 %v1345
        %1665 = vmatpush1.msra.mxu0 %v1344
        %1666 = vmatprep.subr.mxu0 %v1347
        %1667 = vmatpush1.msra.mxu0 %v1346
        %1668 = vmatprep.subr.mxu0 %v1349
        %1669 = vmatpush1.msra.mxu0 %v1348
        %1670 = vmatprep.subr.mxu0 %v1351
        %1671 = vmatpush1.msra.mxu0 %v1350
        %1672 = vmatprep.subr.mxu0 %v1353
        %1673 = vmatpush1.msra.mxu0 %v1352
        %1674 = vmatprep.subr.mxu0 %v1355
        %1675 = vmatpush1.msra.mxu0 %v1354
        %1676 = vmatprep.subr.mxu0 %v1357
        %1677 = vmatpush1.msra.mxu0 %v1356
        %1678 = vmatprep.subr.mxu0 %v1359
        %1679 = vmatpush1.msra.mxu0 %v1358
        %1680 = vmatprep.subr.mxu0 %v1361
        %1681 = vmatpush1.msra.mxu0 %v1360
        %1682 = vmatprep.subr.mxu0 %v1363
        %1683 = vmatpush1.msra.mxu0 %v1362
        %1684 = vmatprep.subr.mxu0 %v1365
        %1685 = vmatpush1.msra.mxu0 %v1364
        %1686 = vmatprep.mubr.f32.mxu0 %v1367
        %1687 = vmatmul.mubr.f32.gmra.mrb[0].mxu0 %v1366
        %v1688 = vpop.f32.mrb[0].mxu0
        %v1689 = vadd.f32 %v1465, %v1688
        %v1690 = vpop.f32.mrb[0].mxu0
        %v1691 = vadd.f32 %v1465, %v1690
        %1692 = vmatprep.mubr.f32.mxu0 %v1369
        %1693 = vmatmul.mubr.f32.gmra.mrb[0].mxu0 %v1368
        %v1694 = vpop.f32.mrb[0].mxu0
        %v1695 = vadd.f32 %v1470, %v1694
        %v1696 = vpop.f32.mrb[0].mxu0
        %v1697 = vadd.f32 %v1470, %v1696
        %1698 = vmatprep.mubr.f32.mxu0 %v1371
        %1699 = vmatmul.mubr.f32.gmra.mrb[0].mxu0 %v1370
        %v1700 = vpop.f32.mrb[0].mxu0
        %v1701 = vadd.f32 %v1475, %v1700
        %v1702 = vpop.f32.mrb[0].mxu0
        %v1703 = vadd.f32 %v1475, %v1702
        %1704 = vmatprep.mubr.f32.mxu0 %v1373
        %1705 = vmatmul.mubr.f32.gmra.mrb[0].mxu0 %v1372
        %v1706 = vpop.f32.mrb[0].mxu0
        %v1707 = vadd.f32 %v1480, %v1706
        %v1708 = vpop.f32.mrb[0].mxu0
        %v1709 = vadd.f32 %v1480, %v1708
        %1710 = vmatprep.mubr.f32.mxu0 %v1375
        %1711 = vmatmul.mubr.f32.gmra.mrb[0].mxu0 %v1374
        %v1712 = vpop.f32.mrb[0].mxu0
        %v1713 = vadd.f32 %v1485, %v1712
        %v1714 = vpop.f32.mrb[0].mxu0
        %v1715 = vadd.f32 %v1485, %v1714
        %1716 = vmatprep.mubr.f32.mxu0 %v1377
        %1717 = vmatmul.mubr.f32.gmra.mrb[0].mxu0 %v1376
        %v1718 = vpop.f32.mrb[0].mxu0
        %v1719 = vadd.f32 %v1490, %v1718
        %v1720 = vpop.f32.mrb[0].mxu0
        %v1721 = vadd.f32 %v1490, %v1720
        %1722 = vmatprep.mubr.f32.mxu0 %v1379
        %1723 = vmatmul.mubr.f32.gmra.mrb[0].mxu0 %v1378
        %v1724 = vpop.f32.mrb[0].mxu0
        %v1725 = vadd.f32 %v1495, %v1724
        %v1726 = vpop.f32.mrb[0].mxu0
        %v1727 = vadd.f32 %v1495, %v1726
        %1728 = vmatprep.mubr.f32.mxu0 %v1381
        %1729 = vmatmul.mubr.f32.gmra.mrb[0].mxu0 %v1380
        %v1730 = vpop.f32.mrb[0].mxu0
        %v1731 = vadd.f32 %v1500, %v1730
        %v1732 = vpop.f32.mrb[0].mxu0
        %v1733 = vadd.f32 %v1500, %v1732
        %1734 = vmatprep.mubr.f32.mxu0 %v1383
        %1735 = vmatmul.mubr.f32.gmra.mrb[0].mxu0 %v1382
        %v1736 = vpop.f32.mrb[0].mxu0
        %v1737 = vadd.f32 %v1505, %v1736
        %v1738 = vpop.f32.mrb[0].mxu0
        %v1739 = vadd.f32 %v1505, %v1738
        %1740 = vmatprep.mubr.f32.mxu0 %v1385
        %1741 = vmatmul.mubr.f32.gmra.mrb[0].mxu0 %v1384
        %v1742 = vpop.f32.mrb[0].mxu0
        %v1743 = vadd.f32 %v1510, %v1742
        %v1744 = vpop.f32.mrb[0].mxu0
        %v1745 = vadd.f32 %v1510, %v1744
        %1746 = vmatprep.mubr.f32.mxu0 %v1387
        %1747 = vmatmul.mubr.f32.gmra.mrb[0].mxu0 %v1386
        %v1748 = vpop.f32.mrb[0].mxu0
        %v1749 = vadd.f32 %v1515, %v1748
        %v1750 = vpop.f32.mrb[0].mxu0
        %v1751 = vadd.f32 %v1515, %v1750
        %1752 = vmatprep.mubr.f32.mxu0 %v1389
        %1753 = vmatmul.mubr.f32.gmra.mrb[0].mxu0 %v1388
        %v1754 = vpop.f32.mrb[0].mxu0
        %v1755 = vadd.f32 %v1520, %v1754
        %v1756 = vpop.f32.mrb[0].mxu0
        %v1757 = vadd.f32 %v1520, %v1756
        %1758 = vmatprep.mubr.f32.mxu0 %v1391
        %1759 = vmatmul.mubr.f32.gmra.mrb[0].mxu0 %v1390
        %v1760 = vpop.f32.mrb[0].mxu0
        %v1761 = vadd.f32 %v1525, %v1760
        %v1762 = vpop.f32.mrb[0].mxu0
        %v1763 = vadd.f32 %v1525, %v1762
        %1764 = vmatprep.mubr.f32.mxu0 %v1393
        %1765 = vmatmul.mubr.f32.gmra.mrb[0].mxu0 %v1392
        %v1766 = vpop.f32.mrb[0].mxu0
        %v1767 = vadd.f32 %v1530, %v1766
        %v1768 = vpop.f32.mrb[0].mxu0
        %v1769 = vadd.f32 %v1530, %v1768
        %1770 = vmatprep.mubr.f32.mxu0 %v1395
        %1771 = vmatmul.mubr.f32.gmra.mrb[0].mxu0 %v1394
        %v1772 = vpop.f32.mrb[0].mxu0
        %v1773 = vadd.f32 %v1535, %v1772
        %v1774 = vpop.f32.mrb[0].mxu0
        %v1775 = vadd.f32 %v1535, %v1774
        %1776 = vmatprep.mubr.f32.mxu0 %v1397
        %1777 = vmatmul.mubr.f32.gmra.mrb[0].mxu0 %v1396
        %v1778 = vpop.f32.mrb[0].mxu0
        %v1779 = vadd.f32 %v1540, %v1778
        %v1780 = vpop.f32.mrb[0].mxu0
        %v1781 = vadd.f32 %v1540, %v1780
        %1782 = vmatprep.mubr.f32.mxu0 %v1399
        %1783 = vmatmul.mubr.f32.gmra.mrb[0].mxu0 %v1398
        %v1784 = vpop.f32.mrb[0].mxu0
        %v1785 = vadd.f32 %v1545, %v1784
        %v1786 = vpop.f32.mrb[0].mxu0
        %v1787 = vadd.f32 %v1545, %v1786
        %1788 = vmatprep.mubr.f32.mxu0 %v1401
        %1789 = vmatmul.mubr.f32.gmra.mrb[0].mxu0 %v1400
        %v1790 = vpop.f32.mrb[0].mxu0
        %v1791 = vadd.f32 %v1550, %v1790
        %v1792 = vpop.f32.mrb[0].mxu0
        %v1793 = vadd.f32 %v1550, %v1792
        %1794 = vmatprep.mubr.f32.mxu0 %v1403
        %1795 = vmatmul.mubr.f32.gmra.mrb[0].mxu0 %v1402
        %v1796 = vpop.f32.mrb[0].mxu0
        %v1797 = vadd.f32 %v1555, %v1796
        %v1798 = vpop.f32.mrb[0].mxu0
        %v1799 = vadd.f32 %v1555, %v1798
        %1800 = vmatprep.mubr.f32.mxu0 %v1405
        %1801 = vmatmul.mubr.f32.gmra.mrb[0].mxu0 %v1404
        %v1802 = vpop.f32.mrb[0].mxu0
        %v1803 = vadd.f32 %v1560, %v1802
        %v1804 = vpop.f32.mrb[0].mxu0
        %v1805 = vadd.f32 %v1560, %v1804
        %1806 = vmatprep.mubr.f32.mxu0 %v1407
        %1807 = vmatmul.mubr.f32.gmra.mrb[0].mxu0 %v1406
        %v1808 = vpop.f32.mrb[0].mxu0
        %v1809 = vadd.f32 %v1565, %v1808
        %v1810 = vpop.f32.mrb[0].mxu0
        %v1811 = vadd.f32 %v1565, %v1810
        %1812 = vmatprep.mubr.f32.mxu0 %v1409
        %1813 = vmatmul.mubr.f32.gmra.mrb[0].mxu0 %v1408
        %v1814 = vpop.f32.mrb[0].mxu0
        %v1815 = vadd.f32 %v1570, %v1814
        %v1816 = vpop.f32.mrb[0].mxu0
        %v1817 = vadd.f32 %v1570, %v1816
        %1818 = vmatprep.mubr.f32.mxu0 %v1411
        %1819 = vmatmul.mubr.f32.gmra.mrb[0].mxu0 %v1410
        %v1820 = vpop.f32.mrb[0].mxu0
        %v1821 = vadd.f32 %v1575, %v1820
        %v1822 = vpop.f32.mrb[0].mxu0
        %v1823 = vadd.f32 %v1575, %v1822
        %1824 = vmatprep.mubr.f32.mxu0 %v1413
        %1825 = vmatmul.mubr.f32.gmra.mrb[0].mxu0 %v1412
        %v1826 = vpop.f32.mrb[0].mxu0
        %v1827 = vadd.f32 %v1580, %v1826
        %v1828 = vpop.f32.mrb[0].mxu0
        %v1829 = vadd.f32 %v1580, %v1828
        %1830 = vmatprep.mubr.f32.mxu0 %v1415
        %1831 = vmatmul.mubr.f32.gmra.mrb[0].mxu0 %v1414
        %v1832 = vpop.f32.mrb[0].mxu0
        %v1833 = vadd.f32 %v1585, %v1832
        %v1834 = vpop.f32.mrb[0].mxu0
        %v1835 = vadd.f32 %v1585, %v1834
        %1836 = vmatprep.mubr.f32.mxu0 %v1417
        %1837 = vmatmul.mubr.f32.gmra.mrb[0].mxu0 %v1416
        %v1838 = vpop.f32.mrb[0].mxu0
        %v1839 = vadd.f32 %v1590, %v1838
        %v1840 = vpop.f32.mrb[0].mxu0
        %v1841 = vadd.f32 %v1590, %v1840
        %1842 = vmatprep.mubr.f32.mxu0 %v1419
        %1843 = vmatmul.mubr.f32.gmra.mrb[0].mxu0 %v1418
        %v1844 = vpop.f32.mrb[0].mxu0
        %v1845 = vadd.f32 %v1595, %v1844
        %v1846 = vpop.f32.mrb[0].mxu0
        %v1847 = vadd.f32 %v1595, %v1846
        %1848 = vmatprep.mubr.f32.mxu0 %v1421
        %1849 = vmatmul.mubr.f32.gmra.mrb[0].mxu0 %v1420
        %v1850 = vpop.f32.mrb[0].mxu0
        %v1851 = vadd.f32 %v1600, %v1850
        %v1852 = vpop.f32.mrb[0].mxu0
        %v1853 = vadd.f32 %v1600, %v1852
        %1854 = vmatprep.mubr.f32.mxu0 %v1423
        %1855 = vmatmul.mubr.f32.gmra.mrb[0].mxu0 %v1422
        %v1856 = vpop.f32.mrb[0].mxu0
        %v1857 = vadd.f32 %v1605, %v1856
        %v1858 = vpop.f32.mrb[0].mxu0
        %v1859 = vadd.f32 %v1605, %v1858
        %1860 = vmatprep.mubr.f32.mxu0 %v1425
        %1861 = vmatmul.mubr.f32.gmra.mrb[0].mxu0 %v1424
        %v1862 = vpop.f32.mrb[0].mxu0
        %v1863 = vadd.f32 %v1610, %v1862
        %v1864 = vpop.f32.mrb[0].mxu0
        %v1865 = vadd.f32 %v1610, %v1864
        %1866 = vmatprep.mubr.f32.mxu0 %v1427
        %1867 = vmatmul.mubr.f32.gmra.mrb[0].mxu0 %v1426
        %v1868 = vpop.f32.mrb[0].mxu0
        %v1869 = vadd.f32 %v1615, %v1868
        %v1870 = vpop.f32.mrb[0].mxu0
        %v1871 = vadd.f32 %v1615, %v1870
        %1872 = vmatprep.mubr.f32.mxu0 %v1429
        %1873 = vmatmul.mubr.f32.gmra.mrb[0].mxu0 %v1428
        %v1874 = vpop.f32.mrb[0].mxu0
        %v1875 = vadd.f32 %v1620, %v1874
        %v1876 = vpop.f32.mrb[0].mxu0
        %v1877 = vadd.f32 %v1620, %v1876
        %1878 = vdwg.mxu0
        %v1879 = vmax.f32 %v1689, 0.0
        %v1880 = vmax.f32 %v1691, 0.0
        %v1881 = vmax.f32 %v1695, 0.0
        %v1882 = vmax.f32 %v1697, 0.0
        %v1883 = vmax.f32 %v1701, 0.0
        %v1884 = vmax.f32 %v1703, 0.0
        %v1885 = vmax.f32 %v1707, 0.0
        %v1886 = vmax.f32 %v1709, 0.0
        %v1887 = vmax.f32 %v1713, 0.0
        %v1888 = vmax.f32 %v1715, 0.0
        %v1889 = vmax.f32 %v1719, 0.0
        %v1890 = vmax.f32 %v1721, 0.0
        %v1891 = vmax.f32 %v1725, 0.0
        %v1892 = vmax.f32 %v1727, 0.0
        %v1893 = vmax.f32 %v1731, 0.0
        %v1894 = vmax.f32 %v1733, 0.0
        %v1895 = vmax.f32 %v1737, 0.0
        %v1896 = vmax.f32 %v1739, 0.0
        %v1897 = vmax.f32 %v1743, 0.0
        %v1898 = vmax.f32 %v1745, 0.0
        %v1899 = vmax.f32 %v1749, 0.0
        %v1900 = vmax.f32 %v1751, 0.0
        %v1901 = vmax.f32 %v1755, 0.0
        %v1902 = vmax.f32 %v1757, 0.0
        %v1903 = vmax.f32 %v1761, 0.0
        %v1904 = vmax.f32 %v1763, 0.0
        %v1905 = vmax.f32 %v1767, 0.0
        %v1906 = vmax.f32 %v1769, 0.0
        %v1907 = vmax.f32 %v1773, 0.0
        %v1908 = vmax.f32 %v1775, 0.0
        %v1909 = vmax.f32 %v1779, 0.0
        %v1910 = vmax.f32 %v1781, 0.0
        %v1911 = vmax.f32 %v1785, 0.0
        %v1912 = vmax.f32 %v1787, 0.0
        %v1913 = vmax.f32 %v1791, 0.0
        %v1914 = vmax.f32 %v1793, 0.0
        %v1915 = vmax.f32 %v1797, 0.0
        %v1916 = vmax.f32 %v1799, 0.0
        %v1917 = vmax.f32 %v1803, 0.0
        %v1918 = vmax.f32 %v1805, 0.0
        %v1919 = vmax.f32 %v1809, 0.0
        %v1920 = vmax.f32 %v1811, 0.0
        %v1921 = vmax.f32 %v1815, 0.0
        %v1922 = vmax.f32 %v1817, 0.0
        %v1923 = vmax.f32 %v1821, 0.0
        %v1924 = vmax.f32 %v1823, 0.0
        %v1925 = vmax.f32 %v1827, 0.0
        %v1926 = vmax.f32 %v1829, 0.0
        %v1927 = vmax.f32 %v1833, 0.0
        %v1928 = vmax.f32 %v1835, 0.0
        %v1929 = vmax.f32 %v1839, 0.0
        %v1930 = vmax.f32 %v1841, 0.0
        %v1931 = vmax.f32 %v1845, 0.0
        %v1932 = vmax.f32 %v1847, 0.0
        %v1933 = vmax.f32 %v1851, 0.0
        %v1934 = vmax.f32 %v1853, 0.0
        %v1935 = vmax.f32 %v1857, 0.0
        %v1936 = vmax.f32 %v1859, 0.0
        %v1937 = vmax.f32 %v1863, 0.0
        %v1938 = vmax.f32 %v1865, 0.0
        %v1939 = vmax.f32 %v1869, 0.0
        %v1940 = vmax.f32 %v1871, 0.0
        %v1941 = vmax.f32 %v1875, 0.0
        %v1942 = vmax.f32 %v1877, 0.0
        %v1943 = vld [vmem:[%s6] sm:$0xff]
        %v1944 = vld [vmem:[%s6 + $0x8] sm:$0xff]
        %v1945 = vld [vmem:[%s6 + $0x10] sm:$0xff]
        %v1946 = vld [vmem:[%s6 + $0x18] sm:$0xff]
        %v1947 = vld [vmem:[%s6 + $0x20] sm:$0xff]
        %v1948 = vld [vmem:[%s6 + $0x28] sm:$0xff]
        %v1949 = vld [vmem:[%s6 + $0x30] sm:$0xff]
        %v1950 = vld [vmem:[%s6 + $0x38] sm:$0xff]
        %v1951 = vld [vmem:[%s6 + $0x40] sm:$0xff]
        %v1952 = vld [vmem:[%s6 + $0x48] sm:$0xff]
        %v1953 = vld [vmem:[%s6 + $0x50] sm:$0xff]
        %v1954 = vld [vmem:[%s6 + $0x58] sm:$0xff]
        %v1955 = vld [vmem:[%s6 + $0x60] sm:$0xff]
        %v1956 = vld [vmem:[%s6 + $0x68] sm:$0xff]
        %v1957 = vld [vmem:[%s6 + $0x70] sm:$0xff]
        %v1958 = vld [vmem:[%s6 + $0x78] sm:$0xff]
        %v1959 = vld [vmem:[%s6 + $0x80] sm:$0xff]
        %v1960 = vld [vmem:[%s6 + $0x88] sm:$0xff]
        %v1961 = vld [vmem:[%s6 + $0x90] sm:$0xff]
        %v1962 = vld [vmem:[%s6 + $0x98] sm:$0xff]
        %v1963 = vld [vmem:[%s6 + $0xa0] sm:$0xff]
        %v1964 = vld [vmem:[%s6 + $0xa8] sm:$0xff]
        %v1965 = vld [vmem:[%s6 + $0xb0] sm:$0xff]
        %v1966 = vld [vmem:[%s6 + $0xb8] sm:$0xff]
        %v1967 = vld [vmem:[%s6 + $0xc0] sm:$0xff]
        %v1968 = vld [vmem:[%s6 + $0xc8] sm:$0xff]
        %v1969 = vld [vmem:[%s6 + $0xd0] sm:$0xff]
        %v1970 = vld [vmem:[%s6 + $0xd8] sm:$0xff]
        %v1971 = vld [vmem:[%s6 + $0xe0] sm:$0xff]
        %v1972 = vld [vmem:[%s6 + $0xe8] sm:$0xff]
        %v1973 = vld [vmem:[%s6 + $0xf0] sm:$0xff]
        %v1974 = vld [vmem:[%s6 + $0xf8] sm:$0xff]
        %1976 = vset.pattern.permute.xlu0 0
        %1977 = vperm.xlu0 %1976, %v1943
        %v1978 = vpop.permute.xlu0 %1977
        %1981 = vset.pattern.permute.xlu0 0
        %1982 = vperm.xlu0 %1981, %v1944
        %v1983 = vpop.permute.xlu0 %1982
        %1986 = vset.pattern.permute.xlu0 0
        %1987 = vperm.xlu0 %1986, %v1945
        %v1988 = vpop.permute.xlu0 %1987
        %1991 = vset.pattern.permute.xlu0 0
        %1992 = vperm.xlu0 %1991, %v1946
        %v1993 = vpop.permute.xlu0 %1992
        %1996 = vset.pattern.permute.xlu0 0
        %1997 = vperm.xlu0 %1996, %v1947
        %v1998 = vpop.permute.xlu0 %1997
        %2001 = vset.pattern.permute.xlu0 0
        %2002 = vperm.xlu0 %2001, %v1948
        %v2003 = vpop.permute.xlu0 %2002
        %2006 = vset.pattern.permute.xlu0 0
        %2007 = vperm.xlu0 %2006, %v1949
        %v2008 = vpop.permute.xlu0 %2007
        %2011 = vset.pattern.permute.xlu0 0
        %2012 = vperm.xlu0 %2011, %v1950
        %v2013 = vpop.permute.xlu0 %2012
        %2016 = vset.pattern.permute.xlu0 0
        %2017 = vperm.xlu0 %2016, %v1951
        %v2018 = vpop.permute.xlu0 %2017
        %2021 = vset.pattern.permute.xlu0 0
        %2022 = vperm.xlu0 %2021, %v1952
        %v2023 = vpop.permute.xlu0 %2022
        %2026 = vset.pattern.permute.xlu0 0
        %2027 = vperm.xlu0 %2026, %v1953
        %v2028 = vpop.permute.xlu0 %2027
        %2031 = vset.pattern.permute.xlu0 0
        %2032 = vperm.xlu0 %2031, %v1954
        %v2033 = vpop.permute.xlu0 %2032
        %2036 = vset.pattern.permute.xlu0 0
        %2037 = vperm.xlu0 %2036, %v1955
        %v2038 = vpop.permute.xlu0 %2037
        %2041 = vset.pattern.permute.xlu0 0
        %2042 = vperm.xlu0 %2041, %v1956
        %v2043 = vpop.permute.xlu0 %2042
        %2046 = vset.pattern.permute.xlu0 0
        %2047 = vperm.xlu0 %2046, %v1957
        %v2048 = vpop.permute.xlu0 %2047
        %2051 = vset.pattern.permute.xlu0 0
        %2052 = vperm.xlu0 %2051, %v1958
        %v2053 = vpop.permute.xlu0 %2052
        %2056 = vset.pattern.permute.xlu0 0
        %2057 = vperm.xlu0 %2056, %v1959
        %v2058 = vpop.permute.xlu0 %2057
        %2061 = vset.pattern.permute.xlu0 0
        %2062 = vperm.xlu0 %2061, %v1960
        %v2063 = vpop.permute.xlu0 %2062
        %2066 = vset.pattern.permute.xlu0 0
        %2067 = vperm.xlu0 %2066, %v1961
        %v2068 = vpop.permute.xlu0 %2067
        %2071 = vset.pattern.permute.xlu0 0
        %2072 = vperm.xlu0 %2071, %v1962
        %v2073 = vpop.permute.xlu0 %2072
        %2076 = vset.pattern.permute.xlu0 0
        %2077 = vperm.xlu0 %2076, %v1963
        %v2078 = vpop.permute.xlu0 %2077
        %2081 = vset.pattern.permute.xlu0 0
        %2082 = vperm.xlu0 %2081, %v1964
        %v2083 = vpop.permute.xlu0 %2082
        %2086 = vset.pattern.permute.xlu0 0
        %2087 = vperm.xlu0 %2086, %v1965
        %v2088 = vpop.permute.xlu0 %2087
        %2091 = vset.pattern.permute.xlu0 0
        %2092 = vperm.xlu0 %2091, %v1966
        %v2093 = vpop.permute.xlu0 %2092
        %2096 = vset.pattern.permute.xlu0 0
        %2097 = vperm.xlu0 %2096, %v1967
        %v2098 = vpop.permute.xlu0 %2097
        %2101 = vset.pattern.permute.xlu0 0
        %2102 = vperm.xlu0 %2101, %v1968
        %v2103 = vpop.permute.xlu0 %2102
        %2106 = vset.pattern.permute.xlu0 0
        %2107 = vperm.xlu0 %2106, %v1969
        %v2108 = vpop.permute.xlu0 %2107
        %2111 = vset.pattern.permute.xlu0 0
        %2112 = vperm.xlu0 %2111, %v1970
        %v2113 = vpop.permute.xlu0 %2112
        %2116 = vset.pattern.permute.xlu0 0
        %2117 = vperm.xlu0 %2116, %v1971
        %v2118 = vpop.permute.xlu0 %2117
        %2121 = vset.pattern.permute.xlu0 0
        %2122 = vperm.xlu0 %2121, %v1972
        %v2123 = vpop.permute.xlu0 %2122
        %2126 = vset.pattern.permute.xlu0 0
        %2127 = vperm.xlu0 %2126, %v1973
        %v2128 = vpop.permute.xlu0 %2127
        %2131 = vset.pattern.permute.xlu0 0
        %2132 = vperm.xlu0 %2131, %v1974
        %v2133 = vpop.permute.xlu0 %2132
        %v2135 = vmul.f32 %v1879, %v1978
        %v2136 = vmul.f32 %v1880, %v1978
        %v2137 = vmul.f32 %v1881, %v1983
        %v2138 = vmul.f32 %v1882, %v1983
        %v2139 = vmul.f32 %v1883, %v1988
        %v2140 = vmul.f32 %v1884, %v1988
        %v2141 = vmul.f32 %v1885, %v1993
        %v2142 = vmul.f32 %v1886, %v1993
        %v2143 = vmul.f32 %v1887, %v1998
        %v2144 = vmul.f32 %v1888, %v1998
        %v2145 = vmul.f32 %v1889, %v2003
        %v2146 = vmul.f32 %v1890, %v2003
        %v2147 = vmul.f32 %v1891, %v2008
        %v2148 = vmul.f32 %v1892, %v2008
        %v2149 = vmul.f32 %v1893, %v2013
        %v2150 = vmul.f32 %v1894, %v2013
        %v2151 = vmul.f32 %v1895, %v2018
        %v2152 = vmul.f32 %v1896, %v2018
        %v2153 = vmul.f32 %v1897, %v2023
        %v2154 = vmul.f32 %v1898, %v2023
        %v2155 = vmul.f32 %v1899, %v2028
        %v2156 = vmul.f32 %v1900, %v2028
        %v2157 = vmul.f32 %v1901, %v2033
        %v2158 = vmul.f32 %v1902, %v2033
        %v2159 = vmul.f32 %v1903, %v2038
        %v2160 = vmul.f32 %v1904, %v2038
        %v2161 = vmul.f32 %v1905, %v2043
        %v2162 = vmul.f32 %v1906, %v2043
        %v2163 = vmul.f32 %v1907, %v2048
        %v2164 = vmul.f32 %v1908, %v2048
        %v2165 = vmul.f32 %v1909, %v2053
        %v2166 = vmul.f32 %v1910, %v2053
        %v2167 = vmul.f32 %v1911, %v2058
        %v2168 = vmul.f32 %v1912, %v2058
        %v2169 = vmul.f32 %v1913, %v2063
        %v2170 = vmul.f32 %v1914, %v2063
        %v2171 = vmul.f32 %v1915, %v2068
        %v2172 = vmul.f32 %v1916, %v2068
        %v2173 = vmul.f32 %v1917, %v2073
        %v2174 = vmul.f32 %v1918, %v2073
        %v2175 = vmul.f32 %v1919, %v2078
        %v2176 = vmul.f32 %v1920, %v2078
        %v2177 = vmul.f32 %v1921, %v2083
        %v2178 = vmul.f32 %v1922, %v2083
        %v2179 = vmul.f32 %v1923, %v2088
        %v2180 = vmul.f32 %v1924, %v2088
        %v2181 = vmul.f32 %v1925, %v2093
        %v2182 = vmul.f32 %v1926, %v2093
        %v2183 = vmul.f32 %v1927, %v2098
        %v2184 = vmul.f32 %v1928, %v2098
        %v2185 = vmul.f32 %v1929, %v2103
        %v2186 = vmul.f32 %v1930, %v2103
        %v2187 = vmul.f32 %v1931, %v2108
        %v2188 = vmul.f32 %v1932, %v2108
        %v2189 = vmul.f32 %v1933, %v2113
        %v2190 = vmul.f32 %v1934, %v2113
        %v2191 = vmul.f32 %v1935, %v2118
        %v2192 = vmul.f32 %v1936, %v2118
        %v2193 = vmul.f32 %v1937, %v2123
        %v2194 = vmul.f32 %v1938, %v2123
        %v2195 = vmul.f32 %v1939, %v2128
        %v2196 = vmul.f32 %v1940, %v2128
        %v2197 = vmul.f32 %v1941, %v2133
        %v2198 = vmul.f32 %v1942, %v2133
        %v2199 = vadd.f32 %v2135, %v2137
        %v2200 = vadd.f32 %v2199, %v2139
        %v2201 = vadd.f32 %v2200, %v2141
        %v2202 = vadd.f32 %v2201, %v2143
        %v2203 = vadd.f32 %v2202, %v2145
        %v2204 = vadd.f32 %v2203, %v2147
        %v2205 = vadd.f32 %v2204, %v2149
        %v2206 = vadd.f32 %v2205, %v2151
        %v2207 = vadd.f32 %v2206, %v2153
        %v2208 = vadd.f32 %v2207, %v2155
        %v2209 = vadd.f32 %v2208, %v2157
        %v2210 = vadd.f32 %v2209, %v2159
        %v2211 = vadd.f32 %v2210, %v2161
        %v2212 = vadd.f32 %v2211, %v2163
        %v2213 = vadd.f32 %v2212, %v2165
        %v2214 = vadd.f32 %v2213, %v2167
        %v2215 = vadd.f32 %v2214, %v2169
        %v2216 = vadd.f32 %v2215, %v2171
        %v2217 = vadd.f32 %v2216, %v2173
        %v2218 = vadd.f32 %v2217, %v2175
        %v2219 = vadd.f32 %v2218, %v2177
        %v2220 = vadd.f32 %v2219, %v2179
        %v2221 = vadd.f32 %v2220, %v2181
        %v2222 = vadd.f32 %v2221, %v2183
        %v2223 = vadd.f32 %v2222, %v2185
        %v2224 = vadd.f32 %v2223, %v2187
        %v2225 = vadd.f32 %v2224, %v2189
        %v2226 = vadd.f32 %v2225, %v2191
        %v2227 = vadd.f32 %v2226, %v2193
        %v2228 = vadd.f32 %v2227, %v2195
        %v2229 = vadd.f32 %v2228, %v2197
        %v2230 = vrot.slane %v2229, 4
        %v2231 = vadd.f32 %v2229, %v2230
        %v2232 = vrot.slane %v2231, 2
        %v2233 = vadd.f32 %v2231, %v2232
        %v2234 = vrot.slane %v2233, 1
        %v2235 = vadd.f32 %v2233, %v2234
        %v2236 = vadd.f32 %v2136, %v2138
        %v2237 = vadd.f32 %v2236, %v2140
        %v2238 = vadd.f32 %v2237, %v2142
        %v2239 = vadd.f32 %v2238, %v2144
        %v2240 = vadd.f32 %v2239, %v2146
        %v2241 = vadd.f32 %v2240, %v2148
        %v2242 = vadd.f32 %v2241, %v2150
        %v2243 = vadd.f32 %v2242, %v2152
        %v2244 = vadd.f32 %v2243, %v2154
        %v2245 = vadd.f32 %v2244, %v2156
        %v2246 = vadd.f32 %v2245, %v2158
        %v2247 = vadd.f32 %v2246, %v2160
        %v2248 = vadd.f32 %v2247, %v2162
        %v2249 = vadd.f32 %v2248, %v2164
        %v2250 = vadd.f32 %v2249, %v2166
        %v2251 = vadd.f32 %v2250, %v2168
        %v2252 = vadd.f32 %v2251, %v2170
        %v2253 = vadd.f32 %v2252, %v2172
        %v2254 = vadd.f32 %v2253, %v2174
        %v2255 = vadd.f32 %v2254, %v2176
        %v2256 = vadd.f32 %v2255, %v2178
        %v2257 = vadd.f32 %v2256, %v2180
        %v2258 = vadd.f32 %v2257, %v2182
        %v2259 = vadd.f32 %v2258, %v2184
        %v2260 = vadd.f32 %v2259, %v2186
        %v2261 = vadd.f32 %v2260, %v2188
        %v2262 = vadd.f32 %v2261, %v2190
        %v2263 = vadd.f32 %v2262, %v2192
        %v2264 = vadd.f32 %v2263, %v2194
        %v2265 = vadd.f32 %v2264, %v2196
        %v2266 = vadd.f32 %v2265, %v2198
        %v2267 = vrot.slane %v2266, 4
        %v2268 = vadd.f32 %v2266, %v2267
        %v2269 = vrot.slane %v2268, 2
        %v2270 = vadd.f32 %v2268, %v2269
        %v2271 = vrot.slane %v2270, 1
        %v2272 = vadd.f32 %v2270, %v2271
        %s2273 = sld [smem:[#allocation2]]
        %v2274 = vstv %s2273
        %v2275 = vadd.f32 %v2235, %v2274
        %v2276 = vadd.f32 %v2272, %v2274
        %v2277 = vxor.u32 %v2275, 2147483648
        %v2278 = vxor.u32 %v2276, 2147483648
        %v2279 = vmul.f32 %v2277, 1.442695
        %v2280 = vpow.pop %v2279
        %v2281 = vmul.f32 %v2278, 1.442695
        %v2282 = vpow.pop %v2281
        %v2283 = vadd.f32 %v2280, 1.0
        %v2284 = vadd.f32 %v2282, 1.0
        %v2285 = vrcp.pop %v2283
        %v2286 = vmul.f32 1.0, %v2285
        %v2287 = vrcp.pop %v2284
        %v2288 = vmul.f32 1.0, %v2287
        %v2291 = vcombine.low %v2286, %v2288
        %v2293 = vunpack.c.l.s4 1966171168
        %v2294 = vunpack.c.0.s8 %v2293
        %v2295 = vlaneseq
        %v2296 = vshrl.u32 %v2295, 7
        %v2297 = vsub.s32 %v2294, %v2296
        %v2298 = vrot.slane %v2291, %v2297
        %v2300 = vunpack.c.l.s4 1966171168
        %v2301 = vunpack.c.0.s8 %v2300
        %v2302 = vlaneseq
        %v2303 = vshrl.u32 %v2302, 7
        %v2304 = vsub.s32 %v2301, %v2303
        %v2305 = vrot.slane %v2298, %v2304
        %v2307 = vlaneseq
        %vm2308 = vcmp.ge.s32.totalorder %v2307, 0
        %vm2309 = vcmp.lt.s32.totalorder %v2307, 256
        %vm2310 = vmand %vm2308, %vm2309
        %2311 = vst.msk [vmem:[%s324] sm:$0x3] %vm2310, %v2305
        %s2312 = sand.u32 %s207, 1
        %s2313 = scalar_lea.sflag [#allocation5], %s2312
        %s2314 = sand.u32 %s207, 1
        %s2315 = smul.addr %s2314, 2
        %s2316 = scalar_lea.vmem [#allocation6], %s2315
        // Predicated region
        $region57: #{tpu_custom_call.1} parent=51 // pred_check
          %p2317 = pneg %p217
        $region58: #{tpu_custom_call.1} parent=51 // pred_check_branch
          %2319 = sbr.rel (%p2317) target = $region60
        $region59: #{tpu_custom_call.1} parent=51 // pred_region
          %s2321 = ssub.s32 32, 32
          %2322 = vsyncadd %s2313, %s2321
          %s2323 = smul.addr %s26, 2
          %s2324 = smul.addr %s2323, 16
          %s2325 = scalar_lea.hbm %s8, %s2324
          %s2327 = sshll.u32 %s2316, 4
          %s2328 = int_to_ptr.vmem [resolvable:$true] %s2327
          %2330 = dma.vmem_to_hbm [thread:$0]  %s2328, 32, %s2325, %s2313
        $region60: #{tpu_custom_call.1} parent=51 // pred_fallthru
          _
      $region52: #{tpu_custom_call.1} parent=5 // pred_fallthru
        _
      %p2331 = scmp.le.s32.totalorder 2, %s21
      // Predicated region
      $region61: #{tpu_custom_call.1} parent=5 // pred_check
        %p2332 = pneg %p2331
      $region62: #{tpu_custom_call.1} parent=5 // pred_check_branch
        %2334 = sbr.rel (%p2332) target = $region64
      $region63: #{tpu_custom_call.1} parent=5 // pred_region
        %s2335 = ssub.s32 %s21, 2
        // Predicated region
        $region65: #{tpu_custom_call.1} parent=63 // pred_check
          %p2336 = pneg %p223
        $region66: #{tpu_custom_call.1} parent=63 // pred_check_branch
          %2338 = sbr.rel (%p2336) target = $region68
        $region67: #{tpu_custom_call.1} parent=63 // pred_region
          %s2339 = sand.u32 %s208, 1
          %s2340 = scalar_lea.sflag [#allocation5], %s2339
          %s2341 = sand.u32 %s208, 1
          %s2342 = smul.addr %s2341, 2
          %s2343 = scalar_lea.vmem [#allocation6], %s2342
          %2344 = dma.done %s2340, 32
        $region68: #{tpu_custom_call.1} parent=63 // pred_fallthru
          _
      $region64: #{tpu_custom_call.1} parent=5 // pred_fallthru
        _
    $region6: #{tpu_custom_call.1} parent=1 // loop_footer
      %s25 = sadd.s32 1, %s21
    $region7: #{tpu_custom_call.1} parent=1 // loop_footer_branch
      %20 = sbr.rel target = $region3
    $region8: #{tpu_custom_call.1} parent=1 // loop_exit
      _
    %2345 = vsyncpa [#allocation4], 1
    %s2346 = scalar_lea.sflag [#allocation4], 1
    %2347 = vsyncpa %s2346, 1
    %2348 = vsyncpa [#allocation5], 1
    %s2349 = scalar_lea.sflag [#allocation5], 1
    %2350 = vsyncpa %s2349, 1

</llo_original>
